<compile_context>
chip_gen: v6e
topology: v6e:2x2x1
jax: 0.10.0
libtpu: 0.0.40
codegen_flags: <defaults>
</compile_context>

<pallas_src>
import functools
import math

import jax
import jax.numpy as jnp
from jax.experimental import pallas as pl
from jax.experimental.pallas import tpu as pltpu


def _round_up(x, m):
    return (x + m - 1) // m * m


# ---------------------------------------------------------------------------
# Kernels
# ---------------------------------------------------------------------------
def siren_kernel_single_k(x_ref, wt_ref, b_ref, o_ref):
    """Whole-K step: o = sin(x @ Wt + b).  (w0 already folded into Wt/b.)"""
    acc = jnp.dot(x_ref[...], wt_ref[...], preferred_element_type=jnp.float32)
    o_ref[...] = jnp.sin(acc + b_ref[...]).astype(o_ref.dtype)


def siren_kernel_multi_k(x_ref, wt_ref, b_ref, o_ref, acc_ref):
    """K-split step with an f32 VMEM accumulator (large dim_in fallback)."""
    k = pl.program_id(1)

    @pl.when(k == 0)
    def _():
        acc_ref[...] = jnp.zeros_like(acc_ref)

    acc_ref[...] += jnp.dot(x_ref[...], wt_ref[...],
                            preferred_element_type=jnp.float32)

    @pl.when(k == pl.num_programs(1) - 1)
    def _():
        o_ref[...] = jnp.sin(acc_ref[...] + b_ref[...]).astype(o_ref.dtype)


# ---------------------------------------------------------------------------
# One-time parameter prep (init-time, NOT per forward call)
# ---------------------------------------------------------------------------
def prepare_siren_params(weight, bias, w0=4.0, compute_dtype=jnp.bfloat16,
                         lane_multiple=128):
    """Transpose [N,K] -> [K,N], fold w0 into weight/bias, pad N lane-dense,
    cast the weight to the compute dtype. Called once at init."""
    N, K = weight.shape
    N_pad = _round_up(N, lane_multiple)
    # Large dim_in is split along K inside the kernel -> pad K to 256-multiples
    # (fills the v6e/v7x 256x256 MXU). Small dim_in stays a single full block.
    K_pad = _round_up(K, 256) if K > 2048 else _round_up(K, 8)
    wt = jnp.zeros((K_pad, N_pad), compute_dtype)
    wt = wt.at[:K, :N].set((w0 * weight.T.astype(jnp.float32)).astype(compute_dtype))
    b = jnp.zeros((1, N_pad), jnp.float32)
    if bias is not None:
        b = b.at[0, :N].set(w0 * bias.astype(jnp.float32))
    return wt, b


# ---------------------------------------------------------------------------
# Tile-size / VMEM heuristics
# ---------------------------------------------------------------------------
def _choose_tm(M, tm):
    """Pick an M row-tile (multiple of 8), bounding over-padding and giving
    v7x's two TensorCores at least two grid steps when there is enough work."""
    M8 = _round_up(max(M, 1), 8)
    tm_eff = min(_round_up(tm, 8), M8)
    # Bound M over-padding to <= ~12.5% (avoid near-2x wasted HBM/MXU work).
    while tm_eff > 256 and (_round_up(M8, tm_eff) - M8) * 8 > M8:
        tm_eff = _round_up(max(tm_eff // 2, 8), 8)
    # v7x: make sure the "parallel" M axis has >= 2 tiles when M is large.
    if M8 // tm_eff < 2 and M8 >= 512:
        tm_eff = _round_up(pl.cdiv(M8, 2), 8)
    tm_eff = max(tm_eff, 8)
    return tm_eff, _round_up(M8, tm_eff)


def _choose_tk(K_pad, tk):
    """256-multiple contraction tile dividing K_pad (K_pad % 256 == 0 here)."""
    tk_eff = max(256, (min(max(tk, 256), K_pad) // 256) * 256)
    while K_pad % tk_eff:
        tk_eff -= 256
    return max(tk_eff, 256)


def _vmem_limit(vmem_est):
    # 56 MiB is safe on every generation (v7x physical VMEM is 64 MiB and
    # needs headroom for compiler-internal scratch); raise the ceiling on
    # v5e/v6e (128 MiB) when the runtime can tell us.
    cap = 56 << 20
    try:
        cap = max(cap, min(int(pltpu.get_tpu_info().vmem_capacity_bytes * 0.8),
                           110 << 20))
    except Exception:
        pass
    return max(32 << 20, min(int(1.5 * vmem_est) + (1 << 20), cap))


# ---------------------------------------------------------------------------
# Forward
# ---------------------------------------------------------------------------
def siren_forward(x, wt_padded, bias_padded, dim_out, *, tm=512, tk=512,
                  compute_dtype=jnp.bfloat16, out_dtype=None,
                  slice_output=True):
    """x: [M, dim_in]; wt_padded: [K_pad, N_pad] (w0 folded, compute dtype);
    bias_padded: [1, N_pad] f32 (w0 folded) -> [M, dim_out]."""
    M, K = x.shape
    K_pad, N_pad = wt_padded.shape
    assert K <= K_pad and dim_out <= N_pad
    out_dtype = x.dtype if out_dtype is None else out_dtype

    tm_eff, M_pad = _choose_tm(M, tm)

    # Common Siren case: the whole weight is small enough to keep resident in
    # VMEM -> single grid axis over M, weight DMA'd exactly once per call.
    w_itemsize = jnp.dtype(wt_padded.dtype).itemsize
    single_k = (K_pad * N_pad * w_itemsize <= (8 << 20)) or (K_pad % 256 != 0)

    # Only pad / cast x when actually required (each wrapper copy is an extra
    # full HBM round-trip of the activations on a memory-bound kernel).
    if M_pad == M and K_pad == K and x.dtype == compute_dtype:
        x_p = x
    else:
        x_p = jnp.zeros((M_pad, K_pad), compute_dtype)
        x_p = x_p.at[:M, :K].set(x.astype(compute_dtype))

    in_bytes = jnp.dtype(compute_dtype).itemsize
    out_bytes = jnp.dtype(out_dtype).itemsize
    cost = pl.CostEstimate(
        flops=2 * M_pad * K_pad * N_pad,
        transcendentals=M_pad * N_pad,
        bytes_accessed=(M_pad * K_pad * in_bytes       # x
                        + K_pad * N_pad * w_itemsize   # weight (once)
                        + N_pad * 4                    # bias
                        + M_pad * N_pad * out_bytes))  # out

    if single_k:
        grid = (M_pad // tm_eff,)
        vmem_est = (2 * tm_eff * K_pad * in_bytes        # x (double-buffered)
                    + K_pad * N_pad * w_itemsize         # resident weight
                    + N_pad * 4                          # resident bias
                    + 2 * tm_eff * N_pad * out_bytes)    # out (double-buffered)
        out = pl.pallas_call(
            siren_kernel_single_k,
            out_shape=jax.ShapeDtypeStruct((M_pad, N_pad), out_dtype),
            grid_spec=pltpu.PrefetchScalarGridSpec(
                num_scalar_prefetch=0,
                grid=grid,
                in_specs=[
                    pl.BlockSpec((tm_eff, K_pad), lambda i: (i, 0)),   # x tile
                    pl.BlockSpec((K_pad, N_pad), lambda i: (0, 0)),    # weight (resident)
                    pl.BlockSpec((1, N_pad), lambda i: (0, 0)),        # bias (resident)
                ],
                out_specs=pl.BlockSpec((tm_eff, N_pad), lambda i: (i, 0)),
            ),
            compiler_params=pltpu.CompilerParams(
                dimension_semantics=("parallel",),
                vmem_limit_bytes=_vmem_limit(vmem_est)),
            cost_estimate=cost,
        )(x_p, wt_padded, bias_padded)
    else:
        # Large dim_in fallback: K grid axis with an f32 accumulator.
        tk_eff = _choose_tk(K_pad, tk)
        grid = (M_pad // tm_eff, K_pad // tk_eff)
        vmem_est = (2 * tm_eff * tk_eff * in_bytes
                    + 2 * tk_eff * N_pad * w_itemsize
                    + N_pad * 4
                    + 2 * tm_eff * N_pad * out_bytes
                    + tm_eff * N_pad * 4)                # f32 accumulator
        out = pl.pallas_call(
            siren_kernel_multi_k,
            out_shape=jax.ShapeDtypeStruct((M_pad, N_pad), out_dtype),
            grid_spec=pltpu.PrefetchScalarGridSpec(
                num_scalar_prefetch=0,
                grid=grid,
                in_specs=[
                    pl.BlockSpec((tm_eff, tk_eff), lambda i, k: (i, k)),
                    pl.BlockSpec((tk_eff, N_pad), lambda i, k: (k, 0)),
                    pl.BlockSpec((1, N_pad), lambda i, k: (0, 0)),
                ],
                out_specs=pl.BlockSpec((tm_eff, N_pad), lambda i, k: (i, 0)),
                scratch_shapes=[pltpu.VMEM((tm_eff, N_pad), jnp.float32)],
            ),
            compiler_params=pltpu.CompilerParams(
                dimension_semantics=("parallel", "arbitrary"),
                vmem_limit_bytes=_vmem_limit(vmem_est)),
            cost_estimate=cost,
        )(x_p, wt_padded, bias_padded)

    if slice_output and (M_pad != M or N_pad != dim_out):
        # TODO(synk): when chaining Siren layers keep the padded bf16 layout
        # (slice_output=False, out_dtype=bf16) to avoid this HBM round-trip.
        out = out[:M, :dim_out]
    return out


def init_siren_params(key, dim_in, dim_out, w0=4.0, c=6.0, is_first=False):
    # Matches Siren.init_: uniform(-w_std, w_std)
    w_std = (1.0 / dim_in) if is_first else (math.sqrt(c / dim_in) / w0)
    kw, kb = jax.random.split(key)
    weight = jax.random.uniform(kw, (dim_out, dim_in), jnp.float32,
                                minval=-w_std, maxval=w_std)
    bias = jax.random.uniform(kb, (dim_out,), jnp.float32,
                              minval=-w_std, maxval=w_std)
    return weight, bias


if __name__ == "__main__":
    key = jax.random.PRNGKey(0)
    k_x, k_p = jax.random.split(key)

    # Small, deliberately non-aligned shapes (exercise the M/N padding paths).
    batch, dim_in, dim_out = 100, 32, 48
    w0, c = 4.0, 6.0

    x = jax.random.normal(k_x, (batch, dim_in), jnp.float32)
    weight, bias = init_siren_params(k_p, dim_in, dim_out, w0=w0, c=c,
                                     is_first=False)

    # One-time parameter prep (transpose + w0 fold + pad + bf16 cast).
    wt_p, b_p = prepare_siren_params(weight, bias, w0=w0)

    out = siren_forward(x, wt_p, b_p, dim_out, tm=512)
    out = jax.block_until_ready(out)
    assert out.shape == (batch, dim_out)
    assert out.dtype == x.dtype

    # Reference matching the kernel math exactly (bf16 operands with w0 folded,
    # f32 MXU accumulation, f32 bias add, sin in f32).
    ref_bf16 = jnp.sin(
        jnp.dot(x.astype(jnp.bfloat16), wt_p[:dim_in, :dim_out],
                preferred_element_type=jnp.float32) + b_p[0, :dim_out])
    # Full-precision reference (PyTorch forward semantics); loose tol for bf16.
    ref_f32 = jnp.sin(w0 * (x @ weight.T + bias))

    assert jnp.allclose(out, ref_bf16, atol=2e-3, rtol=2e-3), \
        float(jnp.max(jnp.abs(out - ref_bf16)))
    assert jnp.allclose(out, ref_f32, atol=6e-2, rtol=6e-2), \
        float(jnp.max(jnp.abs(out - ref_f32)))

    print("KERNEL_OK")
</pallas_src>

<mosaic_0001>
module attributes {stable_mosaic.version = 11 : i64} {
  func.func @siren_kernel_single_k(%arg0: i32, %arg1: memref<104x32xbf16, #tpu.memory_space<vmem>>, %arg2: memref<32x128xbf16, #tpu.memory_space<vmem>>, %arg3: memref<1x128xf32, #tpu.memory_space<vmem>>, %arg4: memref<104x128xf32, #tpu.memory_space<vmem>>) attributes {dimension_semantics = [#tpu.dimension_semantics<parallel>], iteration_bounds = array<i64: 1>, scalar_prefetch = 0 : i64, scratch_operands = 0 : i64, tpu.core_type = #tpu.core_type<tc>, window_params = [{transform_indices = @transform_0, window_bounds = array<i64: 104, 32>}, {pipeline_mode = #tpu.pipeline_mode<synchronous>, transform_indices = @transform_1, window_bounds = array<i64: 32, 128>}, {pipeline_mode = #tpu.pipeline_mode<synchronous>, transform_indices = @transform_2, window_bounds = array<i64: 1, 128>}, {transform_indices = @transform_3, window_bounds = array<i64: 104, 128>}]} {
    %c0 = arith.constant 0 : index
    %c0_0 = arith.constant 0 : index
    %0 = vector.load %arg1[%c0, %c0_0] : memref<104x32xbf16, #tpu.memory_space<vmem>>, vector<104x32xbf16>
    %c0_1 = arith.constant 0 : index
    %c0_2 = arith.constant 0 : index
    %1 = vector.load %arg2[%c0_1, %c0_2] : memref<32x128xbf16, #tpu.memory_space<vmem>>, vector<32x128xbf16>
    %cst = arith.constant dense<0.000000e+00> : vector<104x128xf32>
    %2 = tpu.matmul %0, %1, %cst {dimension_numbers = #tpu.dot_dimension_numbers<[1], [0], [0], [1], [0, 0, 1, 1], [], []>} : vector<104x32xbf16>, vector<32x128xbf16>, vector<104x128xf32> -> vector<104x128xf32>
    %c0_3 = arith.constant 0 : index
    %c0_4 = arith.constant 0 : index
    %3 = vector.load %arg3[%c0_3, %c0_4] : memref<1x128xf32, #tpu.memory_space<vmem>>, vector<1x128xf32>
    %4 = vector.broadcast %3 : vector<1x128xf32> to vector<104x128xf32>
    %5 = arith.addf %2, %4 : vector<104x128xf32>
    %6 = math.sin %5 : vector<104x128xf32>
    %c0_5 = arith.constant 0 : index
    %c0_6 = arith.constant 0 : index
    %7 = vector.load %arg4[%c0_5, %c0_6] : memref<104x128xf32, #tpu.memory_space<vmem>>, vector<104x128xf32>
    tpu.vector_store %arg4[%c0_5, %c0_6], %6 {strides = array<i32>} : memref<104x128xf32, #tpu.memory_space<vmem>>, vector<104x128xf32>,
    return
  }
  func.func @transform_0(%arg0: i32) -> (i32, i32) {
    %c0_i32 = arith.constant 0 : i32
    %c0_i32_0 = arith.constant 0 : i32
    return %arg0, %c0_i32 : i32, i32
  }
  func.func @transform_1(%arg0: i32) -> (i32, i32) {
    %c0_i32 = arith.constant 0 : i32
    %c0_i32_0 = arith.constant 0 : i32
    %c0_i32_1 = arith.constant 0 : i32
    return %c0_i32, %c0_i32_0 : i32, i32
  }
  func.func @transform_2(%arg0: i32) -> (i32, i32) {
    %c0_i32 = arith.constant 0 : i32
    %c0_i32_0 = arith.constant 0 : i32
    %c0_i32_1 = arith.constant 0 : i32
    return %c0_i32, %c0_i32_0 : i32, i32
  }
  func.func @transform_3(%arg0: i32) -> (i32, i32) {
    %c0_i32 = arith.constant 0 : i32
    %c0_i32_0 = arith.constant 0 : i32
    return %arg0, %c0_i32 : i32, i32
  }
}

</mosaic_0001>

<llo_original>
// kernel: tpu_custom_call.1
$region0: #{tpu_custom_call.1}
  #allocation0 [shape = 'u32[]', space=smem, size = 0x4, offset = 0x4, fixed_abs, tag = 'smem constant byte address 0x4 - core index']
  #allocation1 [shape = 'u32[144,128]{1,0:T(1,128)}', space=vmem, size = 0x12000, scoped, tag = 'internal scratch']
  %s0 = inlined_call_operand.vmem [shape: bf16[104,32], index: 0, kind: input, shape index: {}]
  %s1 = inlined_call_operand.vmem [shape: bf16[32,128], index: 1, kind: input, shape index: {}]
  %s2 = inlined_call_operand.vmem [shape: f32[1,128], index: 2, kind: input, shape index: {}]
  %s3 = inlined_call_operand.hbm [shape: f32[104,128], index: 3, kind: output, shape index: {}]
  %s4 = sld [smem:[#allocation0]]
  $region22: #{tpu_custom_call.1} parent=0
    _
  %s6 = ssub.s32 1, %s4
  %s7 = scalar_select 0, %s6, %s4
  $region1: #{tpu_custom_call.1} parent=0
    #allocation2 [shape = 'u8[53248]{0}', space=vmem, size = 0xd000, scoped, tag = 'output window, operand 0, single buffered']
    #allocation3 [shape = 's32[1]{0}', space=sflag, size = 0x4, scoped, tag = 'scoped memory for tpu_custom_call.1']
    %8 = vsyncpa [#allocation3], 0
    // Predicated region
    $region2: #{tpu_custom_call.1} parent=1 // pred_check
      _
    $region3: #{tpu_custom_call.1} parent=1 // pred_check_branch
      %10 = sbr.rel (0) target = $region5
    $region4: #{tpu_custom_call.1} parent=1 // pred_region
      _
    $region5: #{tpu_custom_call.1} parent=1 // pred_fallthru
      _
    // Predicated region
    $region6: #{tpu_custom_call.1} parent=1 // pred_check
      _
    $region7: #{tpu_custom_call.1} parent=1 // pred_check_branch
      %12 = sbr.rel (0) target = $region9
    $region8: #{tpu_custom_call.1} parent=1 // pred_region
      _
    $region9: #{tpu_custom_call.1} parent=1 // pred_fallthru
      _
    // Predicated region
    $region10: #{tpu_custom_call.1} parent=1 // pred_check
      _
    $region11: #{tpu_custom_call.1} parent=1 // pred_check_branch
      %14 = sbr.rel (0) target = $region13
    $region12: #{tpu_custom_call.1} parent=1 // pred_region
      _
    $region13: #{tpu_custom_call.1} parent=1 // pred_fallthru
      _
    %v16 = vld [vmem:[%s0] sm:$0xf]
    %v17 = vld [vmem:[%s0 + $0x4] sm:$0xf]
    %v18 = vld [vmem:[%s0 + $0x8] sm:$0xf]
    %v19 = vld [vmem:[%s0 + $0xc] sm:$0xf]
    %v20 = vld [vmem:[%s0 + $0x10] sm:$0xf]
    %v21 = vld [vmem:[%s0 + $0x14] sm:$0xf]
    %v22 = vld [vmem:[%s0 + $0x18] sm:$0xf]
    %v23 = vld [vmem:[%s0 + $0x1c] sm:$0xf]
    %v24 = vld [vmem:[%s0 + $0x20] sm:$0xf]
    %v25 = vld [vmem:[%s0 + $0x24] sm:$0xf]
    %v26 = vld [vmem:[%s0 + $0x28] sm:$0xf]
    %v27 = vld [vmem:[%s0 + $0x2c] sm:$0xf]
    %v28 = vld [vmem:[%s0 + $0x30] sm:$0xf]
    %v29 = vld [vmem:[%s1] sm:$0xf]
    %v30 = vld [vmem:[%s1 + $0x4] sm:$0xf]
    %v31 = vld [vmem:[%s1 + $0x8] sm:$0xf]
    %v32 = vld [vmem:[%s1 + $0xc] sm:$0xf]
    %v33 = vld [vmem:[%s2] sm:$0x1]
    %v35 = vlaneseq
    %v36 = vshrl.u32 %v35, 7
    %v37 = vsub.s32 0, %v36
    %v38 = vrot.slane %v33, %v37
    %v53 = vunpack.c.l.b16 %v16
    %v54 = vunpack.c.l.b16 %v17
    %v55 = vunpack.c.l.b16 %v18
    %v56 = vunpack.c.l.b16 %v19
    %v57 = vunpack.c.l.b16 %v20
    %v58 = vunpack.c.l.b16 %v21
    %v59 = vunpack.c.l.b16 %v22
    %v60 = vunpack.c.l.b16 %v23
    %v61 = vunpack.c.l.b16 %v24
    %v62 = vunpack.c.l.b16 %v25
    %v63 = vunpack.c.l.b16 %v26
    %v64 = vunpack.c.l.b16 %v27
    %v65 = vunpack.c.l.b16 %v28
    %v66 = vpack.c.b16 %v54, %v53
    %v67 = vpack.c.b16 %v56, %v55
    %v68 = vpack.c.b16 %v58, %v57
    %v69 = vpack.c.b16 %v60, %v59
    %v70 = vpack.c.b16 %v62, %v61
    %v71 = vpack.c.b16 %v64, %v63
    %v72 = vpack.c.b16 %v65, %v65
    %v77 = vunpack.c.l.b16 %v29
    %v78 = vunpack.c.l.b16 %v30
    %v79 = vunpack.c.l.b16 %v31
    %v80 = vunpack.c.l.b16 %v32
    %v81 = vpack.c.b16 %v78, %v77
    %v82 = vpack.c.b16 %v80, %v79
    %vm85 = vcmask 261120
    %v87 = vsel %vm85, %v66, 0
    %v90 = vsel %vm85, %v67, 0
    %v93 = vsel %vm85, %v68, 0
    %v96 = vsel %vm85, %v69, 0
    %v99 = vsel %vm85, %v70, 0
    %v102 = vsel %vm85, %v71, 0
    %v105 = vsel %vm85, %v72, 0
    %107 = vmatprep.subr.bf16.mxu0 0
    %108 = vmatpush1.bf16.msra.mxu0 0
    %109 = vmatprep.subr.bf16.mxu0 0
    %110 = vmatpush1.bf16.msra.mxu0 0
    %111 = vmatprep.subr.bf16.mxu0 0
    %112 = vmatpush1.bf16.msra.mxu0 0
    %113 = vmatprep.subr.bf16.mxu0 0
    %114 = vmatpush1.bf16.msra.mxu0 0
    %115 = vmatprep.subr.bf16.mxu0 0
    %116 = vmatpush1.bf16.msra.mxu0 0
    %117 = vmatprep.subr.bf16.mxu0 0
    %118 = vmatpush1.bf16.msra.mxu0 0
    %119 = vmatprep.subr.bf16.mxu0 0
    %120 = vmatpush1.bf16.msra.mxu0 %v82
    %121 = vmatprep.subr.bf16.mxu0 0
    %122 = vmatpush1.bf16.msra.mxu0 %v81
    %123 = vmatprep.subr.bf16.mxu0 0
    %124 = vmatpush2.bf16.msra.mxu0 0
    %125 = vmatprep.subr.bf16.mxu0 0
    %126 = vmatpush2.bf16.msra.mxu0 0
    %127 = vmatprep.subr.bf16.mxu0 0
    %128 = vmatpush2.bf16.msra.mxu0 0
    %129 = vmatprep.subr.bf16.mxu0 0
    %130 = vmatpush2.bf16.msra.mxu0 0
    %131 = vmatprep.subr.bf16.mxu0 0
    %132 = vmatpush2.bf16.msra.mxu0 0
    %133 = vmatprep.subr.bf16.mxu0 0
    %134 = vmatpush2.bf16.msra.mxu0 0
    %135 = vmatprep.subr.bf16.mxu0 0
    %136 = vmatpush2.bf16.msra.mxu0 0
    %137 = vmatprep.subr.bf16.mxu0 0
    %138 = vmatpush2.bf16.msra.mxu0 0
    %139 = vmatprep.mubr.bf16.mxu0 0
    %140 = vmatmul.mubr.bf16.gmra.mxu0 %v87
    %v141 = vpop.f32.mrf.mxu0
    %v142 = vadd.f32 %v38, %v141
    %v143 = vpop.f32.mrf.mxu0
    %v144 = vpop.f32.mrf.mxu0
    %v145 = vadd.f32 %v38, %v144
    %v146 = vpop.f32.mrf.mxu0
    %147 = vmatprep.mubr.bf16.mxu0 0
    %148 = vmatmul.mubr.bf16.gmra.mxu0 %v90
    %v149 = vpop.f32.mrf.mxu0
    %v150 = vadd.f32 %v38, %v149
    %v151 = vpop.f32.mrf.mxu0
    %v152 = vpop.f32.mrf.mxu0
    %v153 = vadd.f32 %v38, %v152
    %v154 = vpop.f32.mrf.mxu0
    %155 = vmatprep.mubr.bf16.mxu0 0
    %156 = vmatmul.mubr.bf16.gmra.mxu0 %v93
    %v157 = vpop.f32.mrf.mxu0
    %v158 = vadd.f32 %v38, %v157
    %v159 = vpop.f32.mrf.mxu0
    %v160 = vpop.f32.mrf.mxu0
    %v161 = vadd.f32 %v38, %v160
    %v162 = vpop.f32.mrf.mxu0
    %163 = vmatprep.mubr.bf16.mxu0 0
    %164 = vmatmul.mubr.bf16.gmra.mxu0 %v96
    %v165 = vpop.f32.mrf.mxu0
    %v166 = vadd.f32 %v38, %v165
    %v167 = vpop.f32.mrf.mxu0
    %v168 = vpop.f32.mrf.mxu0
    %v169 = vadd.f32 %v38, %v168
    %v170 = vpop.f32.mrf.mxu0
    %171 = vmatprep.mubr.bf16.mxu0 0
    %172 = vmatmul.mubr.bf16.gmra.mxu0 %v99
    %v173 = vpop.f32.mrf.mxu0
    %v174 = vadd.f32 %v38, %v173
    %v175 = vpop.f32.mrf.mxu0
    %v176 = vpop.f32.mrf.mxu0
    %v177 = vadd.f32 %v38, %v176
    %v178 = vpop.f32.mrf.mxu0
    %179 = vmatprep.mubr.bf16.mxu0 0
    %180 = vmatmul.mubr.bf16.gmra.mxu0 %v102
    %v181 = vpop.f32.mrf.mxu0
    %v182 = vadd.f32 %v38, %v181
    %v183 = vpop.f32.mrf.mxu0
    %v184 = vpop.f32.mrf.mxu0
    %v185 = vadd.f32 %v38, %v184
    %v186 = vpop.f32.mrf.mxu0
    %187 = vmatprep.mubr.bf16.mxu0 0
    %188 = vmatmul.mubr.bf16.gmra.mxu0 %v105
    %v189 = vpop.f32.mrf.mxu0
    %v190 = vadd.f32 %v38, %v189
    %v191 = vpop.f32.mrf.mxu0
    %v192 = vpop.f32.mrf.mxu0
    %v193 = vpop.f32.mrf.mxu0
    %194 = vdwg.mxu0
    %v195 = vand.u32 2147483647, %v142
    %vm196 = vcmp.le.f32.partialorder %v195, 0.7853982
    %vm197 = vcmp.lt.s32.totalorder %v142, 0
    %v198 = vand.u32 %v142, 2139095040
    %v199 = vshrl.u32 %v198, 23
    %v200 = vsub.s32 %v199, 127
    %v201 = vand.u32 2147483647, %v142
    %v202 = vand.u32 %v201, 8388607
    %v203 = vor.u32 %v202, 8388608
    %v204 = vsub.s32 0, %v203
    %v205 = vadd.s32 %v200, 1
    %vm206 = vcmp.gt.s32.totalorder %v205, 0
    %v207 = vsel %vm206, %v205, 0
    %v208 = vshrl.u32 %v207, 5
    %v209 = vand.u32 %v207, 31
    %v210 = vsub.s32 32, %v209
    %v211 = vshrl.u32 683565275, %v210
    %v212 = vshll.u32 683565275, %v209
    %v213 = vshrl.u32 2475754826, %v210
    %v214 = vor.u32 %v212, %v213
    %v215 = vshll.u32 2475754826, %v209
    %v216 = vshrl.u32 2131351028, %v210
    %v217 = vor.u32 %v215, %v216
    %v218 = vshll.u32 2131351028, %v209
    %v219 = vshrl.u32 2102212464, %v210
    %v220 = vor.u32 %v218, %v219
    %v221 = vshll.u32 2102212464, %v209
    %v222 = vshrl.u32 920167782, %v210
    %v223 = vor.u32 %v221, %v222
    %v224 = vshll.u32 920167782, %v209
    %v225 = vshrl.u32 1326507024, %v210
    %v226 = vor.u32 %v224, %v225
    %vm227 = vcmp.lt.s32.totalorder %v208, 1
    %vm228 = vcmp.lt.s32.totalorder %v208, 2
    %vm229 = vcmp.lt.s32.totalorder %v208, 3
    %vm230 = vcmp.lt.s32.totalorder %v208, 4
    %v231 = vsel %vm227, %v211, %v214
    %v232 = vsel %vm230, %v220, 2102212464
    %v233 = vsel %vm229, %v217, %v232
    %v234 = vsel %vm228, %v231, %v233
    %v235 = vsel %vm227, %v214, %v217
    %v236 = vsel %vm230, %v223, 920167782
    %v237 = vsel %vm229, %v220, %v236
    %v238 = vsel %vm228, %v235, %v237
    %v239 = vsel %vm227, %v217, %v220
    %v240 = vsel %vm230, %v226, 1326507024
    %v241 = vsel %vm229, %v223, %v240
    %v242 = vsel %vm228, %v239, %v241
    %v243 = vshll.u32 %v203, 8
    %v244 = vmul.u32.u64.compose %v243, %v242
    %v245 = vextract.low.u32 %v244
    %v246 = vextract.high.u32 %v244
    %v247 = vmul.u32.u64.compose %v243, %v238
    %v248 = vextract.low.u32 %v247
    %v249 = vextract.high.u32 %v247
    %v250 = vmul.u32 %v243, %v234
    %v251 = vadd.s32 %v246, %v248
    %vm252 = vc.u32 %v246, %v248
    %v253 = vadd.s32 %v249, 1
    %v254 = vsel %vm252, %v253, %v249
    %v255 = vadd.s32 %v250, %v254
    %v256 = vadd.s32 %v255, 536870912
    %v257 = vshrl.u32 %v256, 30
    %v258 = vshll.u32 %v257, 30
    %v259 = vsub.s32 %v255, %v258
    %vm260 = vcmp.lt.s32.totalorder %v259, 0
    %v261 = vsub.s32 0, %v259
    %v262 = vsel %vm260, %v261, %v259
    %v263 = vclz %v262
    %v264 = vsub.s32 %v263, 2
    %vm265 = vcmp.gt.s32.totalorder 0, %v264
    %v266 = vsel %vm265, 0, %v264
    %v267 = vsub.s32 32, %v266
    %v268 = vshll.u32 %v259, %v266
    %v269 = vshrl.u32 %v251, %v267
    %v270 = vor.u32 %v268, %v269
    %v271 = vsub.s32 4294967266, %v266
    %v272 = vadd.s32 %v271, 127
    %v273 = vshll.u32 %v272, 23
    %v274 = vor.u32 4788187, %v273
    %v275 = vand.u32 2147483647, %v274
    %v277 = vcvt.s32.f32 %v270
    %v278 = vmul.f32 %v277, %v275
    %v279 = vxor.u32 %v278, 2147483648
    %v280 = vsel %vm197, %v279, %v278
    %v281 = vsub.s32 4, %v257
    %v282 = vsel %vm197, %v281, %v257
    %v283 = vsel %vm196, %v142, %v280
    %v284 = vsel %vm196, 0, %v282
    %v285 = vcosq.f32.pop %v283
    %v286 = vsinq.f32.pop %v283
    %vm287 = vweird.f32 %v142
    %v288 = vadd.s32 %v284, 3
    %v289 = vand.u32 %v288, 3
    %vm290 = vcmp.lt.s32.totalorder %v289, 2
    %vm291 = vcmp.eq.s32.totalorder %v289, 0
    %v292 = vxor.u32 %v286, 2147483648
    %v293 = vsel %vm291, %v285, %v292
    %vm294 = vcmp.eq.s32.totalorder %v289, 2
    %v295 = vxor.u32 %v285, 2147483648
    %v296 = vsel %vm294, %v295, %v286
    %v297 = vsel %vm290, %v293, %v296
    %v298 = vsel %vm287, nan, %v297
    %v299 = vand.u32 2147483647, %v145
    %vm300 = vcmp.le.f32.partialorder %v299, 0.7853982
    %vm301 = vcmp.lt.s32.totalorder %v145, 0
    %v302 = vand.u32 %v145, 2139095040
    %v303 = vshrl.u32 %v302, 23
    %v304 = vsub.s32 %v303, 127
    %v305 = vand.u32 2147483647, %v145
    %v306 = vand.u32 %v305, 8388607
    %v307 = vor.u32 %v306, 8388608
    %v308 = vsub.s32 0, %v307
    %v309 = vadd.s32 %v304, 1
    %vm310 = vcmp.gt.s32.totalorder %v309, 0
    %v311 = vsel %vm310, %v309, 0
    %v312 = vshrl.u32 %v311, 5
    %v313 = vand.u32 %v311, 31
    %v314 = vsub.s32 32, %v313
    %v315 = vshrl.u32 683565275, %v314
    %v316 = vshll.u32 683565275, %v313
    %v317 = vshrl.u32 2475754826, %v314
    %v318 = vor.u32 %v316, %v317
    %v319 = vshll.u32 2475754826, %v313
    %v320 = vshrl.u32 2131351028, %v314
    %v321 = vor.u32 %v319, %v320
    %v322 = vshll.u32 2131351028, %v313
    %v323 = vshrl.u32 2102212464, %v314
    %v324 = vor.u32 %v322, %v323
    %v325 = vshll.u32 2102212464, %v313
    %v326 = vshrl.u32 920167782, %v314
    %v327 = vor.u32 %v325, %v326
    %v328 = vshll.u32 920167782, %v313
    %v329 = vshrl.u32 1326507024, %v314
    %v330 = vor.u32 %v328, %v329
    %vm331 = vcmp.lt.s32.totalorder %v312, 1
    %vm332 = vcmp.lt.s32.totalorder %v312, 2
    %vm333 = vcmp.lt.s32.totalorder %v312, 3
    %vm334 = vcmp.lt.s32.totalorder %v312, 4
    %v335 = vsel %vm331, %v315, %v318
    %v336 = vsel %vm334, %v324, 2102212464
    %v337 = vsel %vm333, %v321, %v336
    %v338 = vsel %vm332, %v335, %v337
    %v339 = vsel %vm331, %v318, %v321
    %v340 = vsel %vm334, %v327, 920167782
    %v341 = vsel %vm333, %v324, %v340
    %v342 = vsel %vm332, %v339, %v341
    %v343 = vsel %vm331, %v321, %v324
    %v344 = vsel %vm334, %v330, 1326507024
    %v345 = vsel %vm333, %v327, %v344
    %v346 = vsel %vm332, %v343, %v345
    %v347 = vshll.u32 %v307, 8
    %v348 = vmul.u32.u64.compose %v347, %v346
    %v349 = vextract.low.u32 %v348
    %v350 = vextract.high.u32 %v348
    %v351 = vmul.u32.u64.compose %v347, %v342
    %v352 = vextract.low.u32 %v351
    %v353 = vextract.high.u32 %v351
    %v354 = vmul.u32 %v347, %v338
    %v355 = vadd.s32 %v350, %v352
    %vm356 = vc.u32 %v350, %v352
    %v357 = vadd.s32 %v353, 1
    %v358 = vsel %vm356, %v357, %v353
    %v359 = vadd.s32 %v354, %v358
    %v360 = vadd.s32 %v359, 536870912
    %v361 = vshrl.u32 %v360, 30
    %v362 = vshll.u32 %v361, 30
    %v363 = vsub.s32 %v359, %v362
    %vm364 = vcmp.lt.s32.totalorder %v363, 0
    %v365 = vsub.s32 0, %v363
    %v366 = vsel %vm364, %v365, %v363
    %v367 = vclz %v366
    %v368 = vsub.s32 %v367, 2
    %vm369 = vcmp.gt.s32.totalorder 0, %v368
    %v370 = vsel %vm369, 0, %v368
    %v371 = vsub.s32 32, %v370
    %v372 = vshll.u32 %v363, %v370
    %v373 = vshrl.u32 %v355, %v371
    %v374 = vor.u32 %v372, %v373
    %v375 = vsub.s32 4294967266, %v370
    %v376 = vadd.s32 %v375, 127
    %v377 = vshll.u32 %v376, 23
    %v378 = vor.u32 4788187, %v377
    %v379 = vand.u32 2147483647, %v378
    %v381 = vcvt.s32.f32 %v374
    %v382 = vmul.f32 %v381, %v379
    %v383 = vxor.u32 %v382, 2147483648
    %v384 = vsel %vm301, %v383, %v382
    %v385 = vsub.s32 4, %v361
    %v386 = vsel %vm301, %v385, %v361
    %v387 = vsel %vm300, %v145, %v384
    %v388 = vsel %vm300, 0, %v386
    %v389 = vcosq.f32.pop %v387
    %v390 = vsinq.f32.pop %v387
    %vm391 = vweird.f32 %v145
    %v392 = vadd.s32 %v388, 3
    %v393 = vand.u32 %v392, 3
    %vm394 = vcmp.lt.s32.totalorder %v393, 2
    %vm395 = vcmp.eq.s32.totalorder %v393, 0
    %v396 = vxor.u32 %v390, 2147483648
    %v397 = vsel %vm395, %v389, %v396
    %vm398 = vcmp.eq.s32.totalorder %v393, 2
    %v399 = vxor.u32 %v389, 2147483648
    %v400 = vsel %vm398, %v399, %v390
    %v401 = vsel %vm394, %v397, %v400
    %v402 = vsel %vm391, nan, %v401
    %v403 = vand.u32 2147483647, %v150
    %vm404 = vcmp.le.f32.partialorder %v403, 0.7853982
    %vm405 = vcmp.lt.s32.totalorder %v150, 0
    %v406 = vand.u32 %v150, 2139095040
    %v407 = vshrl.u32 %v406, 23
    %v408 = vsub.s32 %v407, 127
    %v409 = vand.u32 2147483647, %v150
    %v410 = vand.u32 %v409, 8388607
    %v411 = vor.u32 %v410, 8388608
    %v412 = vsub.s32 0, %v411
    %v413 = vadd.s32 %v408, 1
    %vm414 = vcmp.gt.s32.totalorder %v413, 0
    %v415 = vsel %vm414, %v413, 0
    %v416 = vshrl.u32 %v415, 5
    %v417 = vand.u32 %v415, 31
    %v418 = vsub.s32 32, %v417
    %v419 = vshrl.u32 683565275, %v418
    %v420 = vshll.u32 683565275, %v417
    %v421 = vshrl.u32 2475754826, %v418
    %v422 = vor.u32 %v420, %v421
    %v423 = vshll.u32 2475754826, %v417
    %v424 = vshrl.u32 2131351028, %v418
    %v425 = vor.u32 %v423, %v424
    %v426 = vshll.u32 2131351028, %v417
    %v427 = vshrl.u32 2102212464, %v418
    %v428 = vor.u32 %v426, %v427
    %v429 = vshll.u32 2102212464, %v417
    %v430 = vshrl.u32 920167782, %v418
    %v431 = vor.u32 %v429, %v430
    %v432 = vshll.u32 920167782, %v417
    %v433 = vshrl.u32 1326507024, %v418
    %v434 = vor.u32 %v432, %v433
    %vm435 = vcmp.lt.s32.totalorder %v416, 1
    %vm436 = vcmp.lt.s32.totalorder %v416, 2
    %vm437 = vcmp.lt.s32.totalorder %v416, 3
    %vm438 = vcmp.lt.s32.totalorder %v416, 4
    %v439 = vsel %vm435, %v419, %v422
    %v440 = vsel %vm438, %v428, 2102212464
    %v441 = vsel %vm437, %v425, %v440
    %v442 = vsel %vm436, %v439, %v441
    %v443 = vsel %vm435, %v422, %v425
    %v444 = vsel %vm438, %v431, 920167782
    %v445 = vsel %vm437, %v428, %v444
    %v446 = vsel %vm436, %v443, %v445
    %v447 = vsel %vm435, %v425, %v428
    %v448 = vsel %vm438, %v434, 1326507024
    %v449 = vsel %vm437, %v431, %v448
    %v450 = vsel %vm436, %v447, %v449
    %v451 = vshll.u32 %v411, 8
    %v452 = vmul.u32.u64.compose %v451, %v450
    %v453 = vextract.low.u32 %v452
    %v454 = vextract.high.u32 %v452
    %v455 = vmul.u32.u64.compose %v451, %v446
    %v456 = vextract.low.u32 %v455
    %v457 = vextract.high.u32 %v455
    %v458 = vmul.u32 %v451, %v442
    %v459 = vadd.s32 %v454, %v456
    %vm460 = vc.u32 %v454, %v456
    %v461 = vadd.s32 %v457, 1
    %v462 = vsel %vm460, %v461, %v457
    %v463 = vadd.s32 %v458, %v462
    %v464 = vadd.s32 %v463, 536870912
    %v465 = vshrl.u32 %v464, 30
    %v466 = vshll.u32 %v465, 30
    %v467 = vsub.s32 %v463, %v466
    %vm468 = vcmp.lt.s32.totalorder %v467, 0
    %v469 = vsub.s32 0, %v467
    %v470 = vsel %vm468, %v469, %v467
    %v471 = vclz %v470
    %v472 = vsub.s32 %v471, 2
    %vm473 = vcmp.gt.s32.totalorder 0, %v472
    %v474 = vsel %vm473, 0, %v472
    %v475 = vsub.s32 32, %v474
    %v476 = vshll.u32 %v467, %v474
    %v477 = vshrl.u32 %v459, %v475
    %v478 = vor.u32 %v476, %v477
    %v479 = vsub.s32 4294967266, %v474
    %v480 = vadd.s32 %v479, 127
    %v481 = vshll.u32 %v480, 23
    %v482 = vor.u32 4788187, %v481
    %v483 = vand.u32 2147483647, %v482
    %v485 = vcvt.s32.f32 %v478
    %v486 = vmul.f32 %v485, %v483
    %v487 = vxor.u32 %v486, 2147483648
    %v488 = vsel %vm405, %v487, %v486
    %v489 = vsub.s32 4, %v465
    %v490 = vsel %vm405, %v489, %v465
    %v491 = vsel %vm404, %v150, %v488
    %v492 = vsel %vm404, 0, %v490
    %v493 = vcosq.f32.pop %v491
    %v494 = vsinq.f32.pop %v491
    %vm495 = vweird.f32 %v150
    %v496 = vadd.s32 %v492, 3
    %v497 = vand.u32 %v496, 3
    %vm498 = vcmp.lt.s32.totalorder %v497, 2
    %vm499 = vcmp.eq.s32.totalorder %v497, 0
    %v500 = vxor.u32 %v494, 2147483648
    %v501 = vsel %vm499, %v493, %v500
    %vm502 = vcmp.eq.s32.totalorder %v497, 2
    %v503 = vxor.u32 %v493, 2147483648
    %v504 = vsel %vm502, %v503, %v494
    %v505 = vsel %vm498, %v501, %v504
    %v506 = vsel %vm495, nan, %v505
    %v507 = vand.u32 2147483647, %v153
    %vm508 = vcmp.le.f32.partialorder %v507, 0.7853982
    %vm509 = vcmp.lt.s32.totalorder %v153, 0
    %v510 = vand.u32 %v153, 2139095040
    %v511 = vshrl.u32 %v510, 23
    %v512 = vsub.s32 %v511, 127
    %v513 = vand.u32 2147483647, %v153
    %v514 = vand.u32 %v513, 8388607
    %v515 = vor.u32 %v514, 8388608
    %v516 = vsub.s32 0, %v515
    %v517 = vadd.s32 %v512, 1
    %vm518 = vcmp.gt.s32.totalorder %v517, 0
    %v519 = vsel %vm518, %v517, 0
    %v520 = vshrl.u32 %v519, 5
    %v521 = vand.u32 %v519, 31
    %v522 = vsub.s32 32, %v521
    %v523 = vshrl.u32 683565275, %v522
    %v524 = vshll.u32 683565275, %v521
    %v525 = vshrl.u32 2475754826, %v522
    %v526 = vor.u32 %v524, %v525
    %v527 = vshll.u32 2475754826, %v521
    %v528 = vshrl.u32 2131351028, %v522
    %v529 = vor.u32 %v527, %v528
    %v530 = vshll.u32 2131351028, %v521
    %v531 = vshrl.u32 2102212464, %v522
    %v532 = vor.u32 %v530, %v531
    %v533 = vshll.u32 2102212464, %v521
    %v534 = vshrl.u32 920167782, %v522
    %v535 = vor.u32 %v533, %v534
    %v536 = vshll.u32 920167782, %v521
    %v537 = vshrl.u32 1326507024, %v522
    %v538 = vor.u32 %v536, %v537
    %vm539 = vcmp.lt.s32.totalorder %v520, 1
    %vm540 = vcmp.lt.s32.totalorder %v520, 2
    %vm541 = vcmp.lt.s32.totalorder %v520, 3
    %vm542 = vcmp.lt.s32.totalorder %v520, 4
    %v543 = vsel %vm539, %v523, %v526
    %v544 = vsel %vm542, %v532, 2102212464
    %v545 = vsel %vm541, %v529, %v544
    %v546 = vsel %vm540, %v543, %v545
    %v547 = vsel %vm539, %v526, %v529
    %v548 = vsel %vm542, %v535, 920167782
    %v549 = vsel %vm541, %v532, %v548
    %v550 = vsel %vm540, %v547, %v549
    %v551 = vsel %vm539, %v529, %v532
    %v552 = vsel %vm542, %v538, 1326507024
    %v553 = vsel %vm541, %v535, %v552
    %v554 = vsel %vm540, %v551, %v553
    %v555 = vshll.u32 %v515, 8
    %v556 = vmul.u32.u64.compose %v555, %v554
    %v557 = vextract.low.u32 %v556
    %v558 = vextract.high.u32 %v556
    %v559 = vmul.u32.u64.compose %v555, %v550
    %v560 = vextract.low.u32 %v559
    %v561 = vextract.high.u32 %v559
    %v562 = vmul.u32 %v555, %v546
    %v563 = vadd.s32 %v558, %v560
    %vm564 = vc.u32 %v558, %v560
    %v565 = vadd.s32 %v561, 1
    %v566 = vsel %vm564, %v565, %v561
    %v567 = vadd.s32 %v562, %v566
    %v568 = vadd.s32 %v567, 536870912
    %v569 = vshrl.u32 %v568, 30
    %v570 = vshll.u32 %v569, 30
    %v571 = vsub.s32 %v567, %v570
    %vm572 = vcmp.lt.s32.totalorder %v571, 0
    %v573 = vsub.s32 0, %v571
    %v574 = vsel %vm572, %v573, %v571
    %v575 = vclz %v574
    %v576 = vsub.s32 %v575, 2
    %vm577 = vcmp.gt.s32.totalorder 0, %v576
    %v578 = vsel %vm577, 0, %v576
    %v579 = vsub.s32 32, %v578
    %v580 = vshll.u32 %v571, %v578
    %v581 = vshrl.u32 %v563, %v579
    %v582 = vor.u32 %v580, %v581
    %v583 = vsub.s32 4294967266, %v578
    %v584 = vadd.s32 %v583, 127
    %v585 = vshll.u32 %v584, 23
    %v586 = vor.u32 4788187, %v585
    %v587 = vand.u32 2147483647, %v586
    %v589 = vcvt.s32.f32 %v582
    %v590 = vmul.f32 %v589, %v587
    %v591 = vxor.u32 %v590, 2147483648
    %v592 = vsel %vm509, %v591, %v590
    %v593 = vsub.s32 4, %v569
    %v594 = vsel %vm509, %v593, %v569
    %v595 = vsel %vm508, %v153, %v592
    %v596 = vsel %vm508, 0, %v594
    %v597 = vcosq.f32.pop %v595
    %v598 = vsinq.f32.pop %v595
    %vm599 = vweird.f32 %v153
    %v600 = vadd.s32 %v596, 3
    %v601 = vand.u32 %v600, 3
    %vm602 = vcmp.lt.s32.totalorder %v601, 2
    %vm603 = vcmp.eq.s32.totalorder %v601, 0
    %v604 = vxor.u32 %v598, 2147483648
    %v605 = vsel %vm603, %v597, %v604
    %vm606 = vcmp.eq.s32.totalorder %v601, 2
    %v607 = vxor.u32 %v597, 2147483648
    %v608 = vsel %vm606, %v607, %v598
    %v609 = vsel %vm602, %v605, %v608
    %v610 = vsel %vm599, nan, %v609
    %v611 = vand.u32 2147483647, %v158
    %vm612 = vcmp.le.f32.partialorder %v611, 0.7853982
    %vm613 = vcmp.lt.s32.totalorder %v158, 0
    %v614 = vand.u32 %v158, 2139095040
    %v615 = vshrl.u32 %v614, 23
    %v616 = vsub.s32 %v615, 127
    %v617 = vand.u32 2147483647, %v158
    %v618 = vand.u32 %v617, 8388607
    %v619 = vor.u32 %v618, 8388608
    %v620 = vsub.s32 0, %v619
    %v621 = vadd.s32 %v616, 1
    %vm622 = vcmp.gt.s32.totalorder %v621, 0
    %v623 = vsel %vm622, %v621, 0
    %v624 = vshrl.u32 %v623, 5
    %v625 = vand.u32 %v623, 31
    %v626 = vsub.s32 32, %v625
    %v627 = vshrl.u32 683565275, %v626
    %v628 = vshll.u32 683565275, %v625
    %v629 = vshrl.u32 2475754826, %v626
    %v630 = vor.u32 %v628, %v629
    %v631 = vshll.u32 2475754826, %v625
    %v632 = vshrl.u32 2131351028, %v626
    %v633 = vor.u32 %v631, %v632
    %v634 = vshll.u32 2131351028, %v625
    %v635 = vshrl.u32 2102212464, %v626
    %v636 = vor.u32 %v634, %v635
    %v637 = vshll.u32 2102212464, %v625
    %v638 = vshrl.u32 920167782, %v626
    %v639 = vor.u32 %v637, %v638
    %v640 = vshll.u32 920167782, %v625
    %v641 = vshrl.u32 1326507024, %v626
    %v642 = vor.u32 %v640, %v641
    %vm643 = vcmp.lt.s32.totalorder %v624, 1
    %vm644 = vcmp.lt.s32.totalorder %v624, 2
    %vm645 = vcmp.lt.s32.totalorder %v624, 3
    %vm646 = vcmp.lt.s32.totalorder %v624, 4
    %v647 = vsel %vm643, %v627, %v630
    %v648 = vsel %vm646, %v636, 2102212464
    %v649 = vsel %vm645, %v633, %v648
    %v650 = vsel %vm644, %v647, %v649
    %v651 = vsel %vm643, %v630, %v633
    %v652 = vsel %vm646, %v639, 920167782
    %v653 = vsel %vm645, %v636, %v652
    %v654 = vsel %vm644, %v651, %v653
    %v655 = vsel %vm643, %v633, %v636
    %v656 = vsel %vm646, %v642, 1326507024
    %v657 = vsel %vm645, %v639, %v656
    %v658 = vsel %vm644, %v655, %v657
    %v659 = vshll.u32 %v619, 8
    %v660 = vmul.u32.u64.compose %v659, %v658
    %v661 = vextract.low.u32 %v660
    %v662 = vextract.high.u32 %v660
    %v663 = vmul.u32.u64.compose %v659, %v654
    %v664 = vextract.low.u32 %v663
    %v665 = vextract.high.u32 %v663
    %v666 = vmul.u32 %v659, %v650
    %v667 = vadd.s32 %v662, %v664
    %vm668 = vc.u32 %v662, %v664
    %v669 = vadd.s32 %v665, 1
    %v670 = vsel %vm668, %v669, %v665
    %v671 = vadd.s32 %v666, %v670
    %v672 = vadd.s32 %v671, 536870912
    %v673 = vshrl.u32 %v672, 30
    %v674 = vshll.u32 %v673, 30
    %v675 = vsub.s32 %v671, %v674
    %vm676 = vcmp.lt.s32.totalorder %v675, 0
    %v677 = vsub.s32 0, %v675
    %v678 = vsel %vm676, %v677, %v675
    %v679 = vclz %v678
    %v680 = vsub.s32 %v679, 2
    %vm681 = vcmp.gt.s32.totalorder 0, %v680
    %v682 = vsel %vm681, 0, %v680
    %v683 = vsub.s32 32, %v682
    %v684 = vshll.u32 %v675, %v682
    %v685 = vshrl.u32 %v667, %v683
    %v686 = vor.u32 %v684, %v685
    %v687 = vsub.s32 4294967266, %v682
    %v688 = vadd.s32 %v687, 127
    %v689 = vshll.u32 %v688, 23
    %v690 = vor.u32 4788187, %v689
    %v691 = vand.u32 2147483647, %v690
    %v693 = vcvt.s32.f32 %v686
    %v694 = vmul.f32 %v693, %v691
    %v695 = vxor.u32 %v694, 2147483648
    %v696 = vsel %vm613, %v695, %v694
    %v697 = vsub.s32 4, %v673
    %v698 = vsel %vm613, %v697, %v673
    %v699 = vsel %vm612, %v158, %v696
    %v700 = vsel %vm612, 0, %v698
    %v701 = vcosq.f32.pop %v699
    %v702 = vsinq.f32.pop %v699
    %vm703 = vweird.f32 %v158
    %v704 = vadd.s32 %v700, 3
    %v705 = vand.u32 %v704, 3
    %vm706 = vcmp.lt.s32.totalorder %v705, 2
    %vm707 = vcmp.eq.s32.totalorder %v705, 0
    %v708 = vxor.u32 %v702, 2147483648
    %v709 = vsel %vm707, %v701, %v708
    %vm710 = vcmp.eq.s32.totalorder %v705, 2
    %v711 = vxor.u32 %v701, 2147483648
    %v712 = vsel %vm710, %v711, %v702
    %v713 = vsel %vm706, %v709, %v712
    %v714 = vsel %vm703, nan, %v713
    %v715 = vand.u32 2147483647, %v161
    %vm716 = vcmp.le.f32.partialorder %v715, 0.7853982
    %vm717 = vcmp.lt.s32.totalorder %v161, 0
    %v718 = vand.u32 %v161, 2139095040
    %v719 = vshrl.u32 %v718, 23
    %v720 = vsub.s32 %v719, 127
    %v721 = vand.u32 2147483647, %v161
    %v722 = vand.u32 %v721, 8388607
    %v723 = vor.u32 %v722, 8388608
    %v724 = vsub.s32 0, %v723
    %v725 = vadd.s32 %v720, 1
    %vm726 = vcmp.gt.s32.totalorder %v725, 0
    %v727 = vsel %vm726, %v725, 0
    %v728 = vshrl.u32 %v727, 5
    %v729 = vand.u32 %v727, 31
    %v730 = vsub.s32 32, %v729
    %v731 = vshrl.u32 683565275, %v730
    %v732 = vshll.u32 683565275, %v729
    %v733 = vshrl.u32 2475754826, %v730
    %v734 = vor.u32 %v732, %v733
    %v735 = vshll.u32 2475754826, %v729
    %v736 = vshrl.u32 2131351028, %v730
    %v737 = vor.u32 %v735, %v736
    %v738 = vshll.u32 2131351028, %v729
    %v739 = vshrl.u32 2102212464, %v730
    %v740 = vor.u32 %v738, %v739
    %v741 = vshll.u32 2102212464, %v729
    %v742 = vshrl.u32 920167782, %v730
    %v743 = vor.u32 %v741, %v742
    %v744 = vshll.u32 920167782, %v729
    %v745 = vshrl.u32 1326507024, %v730
    %v746 = vor.u32 %v744, %v745
    %vm747 = vcmp.lt.s32.totalorder %v728, 1
    %vm748 = vcmp.lt.s32.totalorder %v728, 2
    %vm749 = vcmp.lt.s32.totalorder %v728, 3
    %vm750 = vcmp.lt.s32.totalorder %v728, 4
    %v751 = vsel %vm747, %v731, %v734
    %v752 = vsel %vm750, %v740, 2102212464
    %v753 = vsel %vm749, %v737, %v752
    %v754 = vsel %vm748, %v751, %v753
    %v755 = vsel %vm747, %v734, %v737
    %v756 = vsel %vm750, %v743, 920167782
    %v757 = vsel %vm749, %v740, %v756
    %v758 = vsel %vm748, %v755, %v757
    %v759 = vsel %vm747, %v737, %v740
    %v760 = vsel %vm750, %v746, 1326507024
    %v761 = vsel %vm749, %v743, %v760
    %v762 = vsel %vm748, %v759, %v761
    %v763 = vshll.u32 %v723, 8
    %v764 = vmul.u32.u64.compose %v763, %v762
    %v765 = vextract.low.u32 %v764
    %v766 = vextract.high.u32 %v764
    %v767 = vmul.u32.u64.compose %v763, %v758
    %v768 = vextract.low.u32 %v767
    %v769 = vextract.high.u32 %v767
    %v770 = vmul.u32 %v763, %v754
    %v771 = vadd.s32 %v766, %v768
    %vm772 = vc.u32 %v766, %v768
    %v773 = vadd.s32 %v769, 1
    %v774 = vsel %vm772, %v773, %v769
    %v775 = vadd.s32 %v770, %v774
    %v776 = vadd.s32 %v775, 536870912
    %v777 = vshrl.u32 %v776, 30
    %v778 = vshll.u32 %v777, 30
    %v779 = vsub.s32 %v775, %v778
    %vm780 = vcmp.lt.s32.totalorder %v779, 0
    %v781 = vsub.s32 0, %v779
    %v782 = vsel %vm780, %v781, %v779
    %v783 = vclz %v782
    %v784 = vsub.s32 %v783, 2
    %vm785 = vcmp.gt.s32.totalorder 0, %v784
    %v786 = vsel %vm785, 0, %v784
    %v787 = vsub.s32 32, %v786
    %v788 = vshll.u32 %v779, %v786
    %v789 = vshrl.u32 %v771, %v787
    %v790 = vor.u32 %v788, %v789
    %v791 = vsub.s32 4294967266, %v786
    %v792 = vadd.s32 %v791, 127
    %v793 = vshll.u32 %v792, 23
    %v794 = vor.u32 4788187, %v793
    %v795 = vand.u32 2147483647, %v794
    %v797 = vcvt.s32.f32 %v790
    %v798 = vmul.f32 %v797, %v795
    %v799 = vxor.u32 %v798, 2147483648
    %v800 = vsel %vm717, %v799, %v798
    %v801 = vsub.s32 4, %v777
    %v802 = vsel %vm717, %v801, %v777
    %v803 = vsel %vm716, %v161, %v800
    %v804 = vsel %vm716, 0, %v802
    %v805 = vcosq.f32.pop %v803
    %v806 = vsinq.f32.pop %v803
    %vm807 = vweird.f32 %v161
    %v808 = vadd.s32 %v804, 3
    %v809 = vand.u32 %v808, 3
    %vm810 = vcmp.lt.s32.totalorder %v809, 2
    %vm811 = vcmp.eq.s32.totalorder %v809, 0
    %v812 = vxor.u32 %v806, 2147483648
    %v813 = vsel %vm811, %v805, %v812
    %vm814 = vcmp.eq.s32.totalorder %v809, 2
    %v815 = vxor.u32 %v805, 2147483648
    %v816 = vsel %vm814, %v815, %v806
    %v817 = vsel %vm810, %v813, %v816
    %v818 = vsel %vm807, nan, %v817
    %v819 = vand.u32 2147483647, %v166
    %vm820 = vcmp.le.f32.partialorder %v819, 0.7853982
    %vm821 = vcmp.lt.s32.totalorder %v166, 0
    %v822 = vand.u32 %v166, 2139095040
    %v823 = vshrl.u32 %v822, 23
    %v824 = vsub.s32 %v823, 127
    %v825 = vand.u32 2147483647, %v166
    %v826 = vand.u32 %v825, 8388607
    %v827 = vor.u32 %v826, 8388608
    %v828 = vsub.s32 0, %v827
    %v829 = vadd.s32 %v824, 1
    %vm830 = vcmp.gt.s32.totalorder %v829, 0
    %v831 = vsel %vm830, %v829, 0
    %v832 = vshrl.u32 %v831, 5
    %v833 = vand.u32 %v831, 31
    %v834 = vsub.s32 32, %v833
    %v835 = vshrl.u32 683565275, %v834
    %v836 = vshll.u32 683565275, %v833
    %v837 = vshrl.u32 2475754826, %v834
    %v838 = vor.u32 %v836, %v837
    %v839 = vshll.u32 2475754826, %v833
    %v840 = vshrl.u32 2131351028, %v834
    %v841 = vor.u32 %v839, %v840
    %v842 = vshll.u32 2131351028, %v833
    %v843 = vshrl.u32 2102212464, %v834
    %v844 = vor.u32 %v842, %v843
    %v845 = vshll.u32 2102212464, %v833
    %v846 = vshrl.u32 920167782, %v834
    %v847 = vor.u32 %v845, %v846
    %v848 = vshll.u32 920167782, %v833
    %v849 = vshrl.u32 1326507024, %v834
    %v850 = vor.u32 %v848, %v849
    %vm851 = vcmp.lt.s32.totalorder %v832, 1
    %vm852 = vcmp.lt.s32.totalorder %v832, 2
    %vm853 = vcmp.lt.s32.totalorder %v832, 3
    %vm854 = vcmp.lt.s32.totalorder %v832, 4
    %v855 = vsel %vm851, %v835, %v838
    %v856 = vsel %vm854, %v844, 2102212464
    %v857 = vsel %vm853, %v841, %v856
    %v858 = vsel %vm852, %v855, %v857
    %v859 = vsel %vm851, %v838, %v841
    %v860 = vsel %vm854, %v847, 920167782
    %v861 = vsel %vm853, %v844, %v860
    %v862 = vsel %vm852, %v859, %v861
    %v863 = vsel %vm851, %v841, %v844
    %v864 = vsel %vm854, %v850, 1326507024
    %v865 = vsel %vm853, %v847, %v864
    %v866 = vsel %vm852, %v863, %v865
    %v867 = vshll.u32 %v827, 8
    %v868 = vmul.u32.u64.compose %v867, %v866
    %v869 = vextract.low.u32 %v868
    %v870 = vextract.high.u32 %v868
    %v871 = vmul.u32.u64.compose %v867, %v862
    %v872 = vextract.low.u32 %v871
    %v873 = vextract.high.u32 %v871
    %v874 = vmul.u32 %v867, %v858
    %v875 = vadd.s32 %v870, %v872
    %vm876 = vc.u32 %v870, %v872
    %v877 = vadd.s32 %v873, 1
    %v878 = vsel %vm876, %v877, %v873
    %v879 = vadd.s32 %v874, %v878
    %v880 = vadd.s32 %v879, 536870912
    %v881 = vshrl.u32 %v880, 30
    %v882 = vshll.u32 %v881, 30
    %v883 = vsub.s32 %v879, %v882
    %vm884 = vcmp.lt.s32.totalorder %v883, 0
    %v885 = vsub.s32 0, %v883
    %v886 = vsel %vm884, %v885, %v883
    %v887 = vclz %v886
    %v888 = vsub.s32 %v887, 2
    %vm889 = vcmp.gt.s32.totalorder 0, %v888
    %v890 = vsel %vm889, 0, %v888
    %v891 = vsub.s32 32, %v890
    %v892 = vshll.u32 %v883, %v890
    %v893 = vshrl.u32 %v875, %v891
    %v894 = vor.u32 %v892, %v893
    %v895 = vsub.s32 4294967266, %v890
    %v896 = vadd.s32 %v895, 127
    %v897 = vshll.u32 %v896, 23
    %v898 = vor.u32 4788187, %v897
    %v899 = vand.u32 2147483647, %v898
    %v901 = vcvt.s32.f32 %v894
    %v902 = vmul.f32 %v901, %v899
    %v903 = vxor.u32 %v902, 2147483648
    %v904 = vsel %vm821, %v903, %v902
    %v905 = vsub.s32 4, %v881
    %v906 = vsel %vm821, %v905, %v881
    %v907 = vsel %vm820, %v166, %v904
    %v908 = vsel %vm820, 0, %v906
    %v909 = vcosq.f32.pop %v907
    %v910 = vsinq.f32.pop %v907
    %vm911 = vweird.f32 %v166
    %v912 = vadd.s32 %v908, 3
    %v913 = vand.u32 %v912, 3
    %vm914 = vcmp.lt.s32.totalorder %v913, 2
    %vm915 = vcmp.eq.s32.totalorder %v913, 0
    %v916 = vxor.u32 %v910, 2147483648
    %v917 = vsel %vm915, %v909, %v916
    %vm918 = vcmp.eq.s32.totalorder %v913, 2
    %v919 = vxor.u32 %v909, 2147483648
    %v920 = vsel %vm918, %v919, %v910
    %v921 = vsel %vm914, %v917, %v920
    %v922 = vsel %vm911, nan, %v921
    %v923 = vand.u32 2147483647, %v169
    %vm924 = vcmp.le.f32.partialorder %v923, 0.7853982
    %vm925 = vcmp.lt.s32.totalorder %v169, 0
    %v926 = vand.u32 %v169, 2139095040
    %v927 = vshrl.u32 %v926, 23
    %v928 = vsub.s32 %v927, 127
    %v929 = vand.u32 2147483647, %v169
    %v930 = vand.u32 %v929, 8388607
    %v931 = vor.u32 %v930, 8388608
    %v932 = vsub.s32 0, %v931
    %v933 = vadd.s32 %v928, 1
    %vm934 = vcmp.gt.s32.totalorder %v933, 0
    %v935 = vsel %vm934, %v933, 0
    %v936 = vshrl.u32 %v935, 5
    %v937 = vand.u32 %v935, 31
    %v938 = vsub.s32 32, %v937
    %v939 = vshrl.u32 683565275, %v938
    %v940 = vshll.u32 683565275, %v937
    %v941 = vshrl.u32 2475754826, %v938
    %v942 = vor.u32 %v940, %v941
    %v943 = vshll.u32 2475754826, %v937
    %v944 = vshrl.u32 2131351028, %v938
    %v945 = vor.u32 %v943, %v944
    %v946 = vshll.u32 2131351028, %v937
    %v947 = vshrl.u32 2102212464, %v938
    %v948 = vor.u32 %v946, %v947
    %v949 = vshll.u32 2102212464, %v937
    %v950 = vshrl.u32 920167782, %v938
    %v951 = vor.u32 %v949, %v950
    %v952 = vshll.u32 920167782, %v937
    %v953 = vshrl.u32 1326507024, %v938
    %v954 = vor.u32 %v952, %v953
    %vm955 = vcmp.lt.s32.totalorder %v936, 1
    %vm956 = vcmp.lt.s32.totalorder %v936, 2
    %vm957 = vcmp.lt.s32.totalorder %v936, 3
    %vm958 = vcmp.lt.s32.totalorder %v936, 4
    %v959 = vsel %vm955, %v939, %v942
    %v960 = vsel %vm958, %v948, 2102212464
    %v961 = vsel %vm957, %v945, %v960
    %v962 = vsel %vm956, %v959, %v961
    %v963 = vsel %vm955, %v942, %v945
    %v964 = vsel %vm958, %v951, 920167782
    %v965 = vsel %vm957, %v948, %v964
    %v966 = vsel %vm956, %v963, %v965
    %v967 = vsel %vm955, %v945, %v948
    %v968 = vsel %vm958, %v954, 1326507024
    %v969 = vsel %vm957, %v951, %v968
    %v970 = vsel %vm956, %v967, %v969
    %v971 = vshll.u32 %v931, 8
    %v972 = vmul.u32.u64.compose %v971, %v970
    %v973 = vextract.low.u32 %v972
    %v974 = vextract.high.u32 %v972
    %v975 = vmul.u32.u64.compose %v971, %v966
    %v976 = vextract.low.u32 %v975
    %v977 = vextract.high.u32 %v975
    %v978 = vmul.u32 %v971, %v962
    %v979 = vadd.s32 %v974, %v976
    %vm980 = vc.u32 %v974, %v976
    %v981 = vadd.s32 %v977, 1
    %v982 = vsel %vm980, %v981, %v977
    %v983 = vadd.s32 %v978, %v982
    %v984 = vadd.s32 %v983, 536870912
    %v985 = vshrl.u32 %v984, 30
    %v986 = vshll.u32 %v985, 30
    %v987 = vsub.s32 %v983, %v986
    %vm988 = vcmp.lt.s32.totalorder %v987, 0
    %v989 = vsub.s32 0, %v987
    %v990 = vsel %vm988, %v989, %v987
    %v991 = vclz %v990
    %v992 = vsub.s32 %v991, 2
    %vm993 = vcmp.gt.s32.totalorder 0, %v992
    %v994 = vsel %vm993, 0, %v992
    %v995 = vsub.s32 32, %v994
    %v996 = vshll.u32 %v987, %v994
    %v997 = vshrl.u32 %v979, %v995
    %v998 = vor.u32 %v996, %v997
    %v999 = vsub.s32 4294967266, %v994
    %v1000 = vadd.s32 %v999, 127
    %v1001 = vshll.u32 %v1000, 23
    %v1002 = vor.u32 4788187, %v1001
    %v1003 = vand.u32 2147483647, %v1002
    %v1005 = vcvt.s32.f32 %v998
    %v1006 = vmul.f32 %v1005, %v1003
    %v1007 = vxor.u32 %v1006, 2147483648
    %v1008 = vsel %vm925, %v1007, %v1006
    %v1009 = vsub.s32 4, %v985
    %v1010 = vsel %vm925, %v1009, %v985
    %v1011 = vsel %vm924, %v169, %v1008
    %v1012 = vsel %vm924, 0, %v1010
    %v1013 = vcosq.f32.pop %v1011
    %v1014 = vsinq.f32.pop %v1011
    %vm1015 = vweird.f32 %v169
    %v1016 = vadd.s32 %v1012, 3
    %v1017 = vand.u32 %v1016, 3
    %vm1018 = vcmp.lt.s32.totalorder %v1017, 2
    %vm1019 = vcmp.eq.s32.totalorder %v1017, 0
    %v1020 = vxor.u32 %v1014, 2147483648
    %v1021 = vsel %vm1019, %v1013, %v1020
    %vm1022 = vcmp.eq.s32.totalorder %v1017, 2
    %v1023 = vxor.u32 %v1013, 2147483648
    %v1024 = vsel %vm1022, %v1023, %v1014
    %v1025 = vsel %vm1018, %v1021, %v1024
    %v1026 = vsel %vm1015, nan, %v1025
    %v1027 = vand.u32 2147483647, %v174
    %vm1028 = vcmp.le.f32.partialorder %v1027, 0.7853982
    %vm1029 = vcmp.lt.s32.totalorder %v174, 0
    %v1030 = vand.u32 %v174, 2139095040
    %v1031 = vshrl.u32 %v1030, 23
    %v1032 = vsub.s32 %v1031, 127
    %v1033 = vand.u32 2147483647, %v174
    %v1034 = vand.u32 %v1033, 8388607
    %v1035 = vor.u32 %v1034, 8388608
    %v1036 = vsub.s32 0, %v1035
    %v1037 = vadd.s32 %v1032, 1
    %vm1038 = vcmp.gt.s32.totalorder %v1037, 0
    %v1039 = vsel %vm1038, %v1037, 0
    %v1040 = vshrl.u32 %v1039, 5
    %v1041 = vand.u32 %v1039, 31
    %v1042 = vsub.s32 32, %v1041
    %v1043 = vshrl.u32 683565275, %v1042
    %v1044 = vshll.u32 683565275, %v1041
    %v1045 = vshrl.u32 2475754826, %v1042
    %v1046 = vor.u32 %v1044, %v1045
    %v1047 = vshll.u32 2475754826, %v1041
    %v1048 = vshrl.u32 2131351028, %v1042
    %v1049 = vor.u32 %v1047, %v1048
    %v1050 = vshll.u32 2131351028, %v1041
    %v1051 = vshrl.u32 2102212464, %v1042
    %v1052 = vor.u32 %v1050, %v1051
    %v1053 = vshll.u32 2102212464, %v1041
    %v1054 = vshrl.u32 920167782, %v1042
    %v1055 = vor.u32 %v1053, %v1054
    %v1056 = vshll.u32 920167782, %v1041
    %v1057 = vshrl.u32 1326507024, %v1042
    %v1058 = vor.u32 %v1056, %v1057
    %vm1059 = vcmp.lt.s32.totalorder %v1040, 1
    %vm1060 = vcmp.lt.s32.totalorder %v1040, 2
    %vm1061 = vcmp.lt.s32.totalorder %v1040, 3
    %vm1062 = vcmp.lt.s32.totalorder %v1040, 4
    %v1063 = vsel %vm1059, %v1043, %v1046
    %v1064 = vsel %vm1062, %v1052, 2102212464
    %v1065 = vsel %vm1061, %v1049, %v1064
    %v1066 = vsel %vm1060, %v1063, %v1065
    %v1067 = vsel %vm1059, %v1046, %v1049
    %v1068 = vsel %vm1062, %v1055, 920167782
    %v1069 = vsel %vm1061, %v1052, %v1068
    %v1070 = vsel %vm1060, %v1067, %v1069
    %v1071 = vsel %vm1059, %v1049, %v1052
    %v1072 = vsel %vm1062, %v1058, 1326507024
    %v1073 = vsel %vm1061, %v1055, %v1072
    %v1074 = vsel %vm1060, %v1071, %v1073
    %v1075 = vshll.u32 %v1035, 8
    %v1076 = vmul.u32.u64.compose %v1075, %v1074
    %v1077 = vextract.low.u32 %v1076
    %v1078 = vextract.high.u32 %v1076
    %v1079 = vmul.u32.u64.compose %v1075, %v1070
    %v1080 = vextract.low.u32 %v1079
    %v1081 = vextract.high.u32 %v1079
    %v1082 = vmul.u32 %v1075, %v1066
    %v1083 = vadd.s32 %v1078, %v1080
    %vm1084 = vc.u32 %v1078, %v1080
    %v1085 = vadd.s32 %v1081, 1
    %v1086 = vsel %vm1084, %v1085, %v1081
    %v1087 = vadd.s32 %v1082, %v1086
    %v1088 = vadd.s32 %v1087, 536870912
    %v1089 = vshrl.u32 %v1088, 30
    %v1090 = vshll.u32 %v1089, 30
    %v1091 = vsub.s32 %v1087, %v1090
    %vm1092 = vcmp.lt.s32.totalorder %v1091, 0
    %v1093 = vsub.s32 0, %v1091
    %v1094 = vsel %vm1092, %v1093, %v1091
    %v1095 = vclz %v1094
    %v1096 = vsub.s32 %v1095, 2
    %vm1097 = vcmp.gt.s32.totalorder 0, %v1096
    %v1098 = vsel %vm1097, 0, %v1096
    %v1099 = vsub.s32 32, %v1098
    %v1100 = vshll.u32 %v1091, %v1098
    %v1101 = vshrl.u32 %v1083, %v1099
    %v1102 = vor.u32 %v1100, %v1101
    %v1103 = vsub.s32 4294967266, %v1098
    %v1104 = vadd.s32 %v1103, 127
    %v1105 = vshll.u32 %v1104, 23
    %v1106 = vor.u32 4788187, %v1105
    %v1107 = vand.u32 2147483647, %v1106
    %v1109 = vcvt.s32.f32 %v1102
    %v1110 = vmul.f32 %v1109, %v1107
    %v1111 = vxor.u32 %v1110, 2147483648
    %v1112 = vsel %vm1029, %v1111, %v1110
    %v1113 = vsub.s32 4, %v1089
    %v1114 = vsel %vm1029, %v1113, %v1089
    %v1115 = vsel %vm1028, %v174, %v1112
    %v1116 = vsel %vm1028, 0, %v1114
    %v1117 = vcosq.f32.pop %v1115
    %v1118 = vsinq.f32.pop %v1115
    %vm1119 = vweird.f32 %v174
    %v1120 = vadd.s32 %v1116, 3
    %v1121 = vand.u32 %v1120, 3
    %vm1122 = vcmp.lt.s32.totalorder %v1121, 2
    %vm1123 = vcmp.eq.s32.totalorder %v1121, 0
    %v1124 = vxor.u32 %v1118, 2147483648
    %v1125 = vsel %vm1123, %v1117, %v1124
    %vm1126 = vcmp.eq.s32.totalorder %v1121, 2
    %v1127 = vxor.u32 %v1117, 2147483648
    %v1128 = vsel %vm1126, %v1127, %v1118
    %v1129 = vsel %vm1122, %v1125, %v1128
    %v1130 = vsel %vm1119, nan, %v1129
    %v1131 = vand.u32 2147483647, %v177
    %vm1132 = vcmp.le.f32.partialorder %v1131, 0.7853982
    %vm1133 = vcmp.lt.s32.totalorder %v177, 0
    %v1134 = vand.u32 %v177, 2139095040
    %v1135 = vshrl.u32 %v1134, 23
    %v1136 = vsub.s32 %v1135, 127
    %v1137 = vand.u32 2147483647, %v177
    %v1138 = vand.u32 %v1137, 8388607
    %v1139 = vor.u32 %v1138, 8388608
    %v1140 = vsub.s32 0, %v1139
    %v1141 = vadd.s32 %v1136, 1
    %vm1142 = vcmp.gt.s32.totalorder %v1141, 0
    %v1143 = vsel %vm1142, %v1141, 0
    %v1144 = vshrl.u32 %v1143, 5
    %v1145 = vand.u32 %v1143, 31
    %v1146 = vsub.s32 32, %v1145
    %v1147 = vshrl.u32 683565275, %v1146
    %v1148 = vshll.u32 683565275, %v1145
    %v1149 = vshrl.u32 2475754826, %v1146
    %v1150 = vor.u32 %v1148, %v1149
    %v1151 = vshll.u32 2475754826, %v1145
    %v1152 = vshrl.u32 2131351028, %v1146
    %v1153 = vor.u32 %v1151, %v1152
    %v1154 = vshll.u32 2131351028, %v1145
    %v1155 = vshrl.u32 2102212464, %v1146
    %v1156 = vor.u32 %v1154, %v1155
    %v1157 = vshll.u32 2102212464, %v1145
    %v1158 = vshrl.u32 920167782, %v1146
    %v1159 = vor.u32 %v1157, %v1158
    %v1160 = vshll.u32 920167782, %v1145
    %v1161 = vshrl.u32 1326507024, %v1146
    %v1162 = vor.u32 %v1160, %v1161
    %vm1163 = vcmp.lt.s32.totalorder %v1144, 1
    %vm1164 = vcmp.lt.s32.totalorder %v1144, 2
    %vm1165 = vcmp.lt.s32.totalorder %v1144, 3
    %vm1166 = vcmp.lt.s32.totalorder %v1144, 4
    %v1167 = vsel %vm1163, %v1147, %v1150
    %v1168 = vsel %vm1166, %v1156, 2102212464
    %v1169 = vsel %vm1165, %v1153, %v1168
    %v1170 = vsel %vm1164, %v1167, %v1169
    %v1171 = vsel %vm1163, %v1150, %v1153
    %v1172 = vsel %vm1166, %v1159, 920167782
    %v1173 = vsel %vm1165, %v1156, %v1172
    %v1174 = vsel %vm1164, %v1171, %v1173
    %v1175 = vsel %vm1163, %v1153, %v1156
    %v1176 = vsel %vm1166, %v1162, 1326507024
    %v1177 = vsel %vm1165, %v1159, %v1176
    %v1178 = vsel %vm1164, %v1175, %v1177
    %v1179 = vshll.u32 %v1139, 8
    %v1180 = vmul.u32.u64.compose %v1179, %v1178
    %v1181 = vextract.low.u32 %v1180
    %v1182 = vextract.high.u32 %v1180
    %v1183 = vmul.u32.u64.compose %v1179, %v1174
    %v1184 = vextract.low.u32 %v1183
    %v1185 = vextract.high.u32 %v1183
    %v1186 = vmul.u32 %v1179, %v1170
    %v1187 = vadd.s32 %v1182, %v1184
    %vm1188 = vc.u32 %v1182, %v1184
    %v1189 = vadd.s32 %v1185, 1
    %v1190 = vsel %vm1188, %v1189, %v1185
    %v1191 = vadd.s32 %v1186, %v1190
    %v1192 = vadd.s32 %v1191, 536870912
    %v1193 = vshrl.u32 %v1192, 30
    %v1194 = vshll.u32 %v1193, 30
    %v1195 = vsub.s32 %v1191, %v1194
    %vm1196 = vcmp.lt.s32.totalorder %v1195, 0
    %v1197 = vsub.s32 0, %v1195
    %v1198 = vsel %vm1196, %v1197, %v1195
    %v1199 = vclz %v1198
    %v1200 = vsub.s32 %v1199, 2
    %vm1201 = vcmp.gt.s32.totalorder 0, %v1200
    %v1202 = vsel %vm1201, 0, %v1200
    %v1203 = vsub.s32 32, %v1202
    %v1204 = vshll.u32 %v1195, %v1202
    %v1205 = vshrl.u32 %v1187, %v1203
    %v1206 = vor.u32 %v1204, %v1205
    %v1207 = vsub.s32 4294967266, %v1202
    %v1208 = vadd.s32 %v1207, 127
    %v1209 = vshll.u32 %v1208, 23
    %v1210 = vor.u32 4788187, %v1209
    %v1211 = vand.u32 2147483647, %v1210
    %v1213 = vcvt.s32.f32 %v1206
    %v1214 = vmul.f32 %v1213, %v1211
    %v1215 = vxor.u32 %v1214, 2147483648
    %v1216 = vsel %vm1133, %v1215, %v1214
    %v1217 = vsub.s32 4, %v1193
    %v1218 = vsel %vm1133, %v1217, %v1193
    %v1219 = vsel %vm1132, %v177, %v1216
    %v1220 = vsel %vm1132, 0, %v1218
    %v1221 = vcosq.f32.pop %v1219
    %v1222 = vsinq.f32.pop %v1219
    %vm1223 = vweird.f32 %v177
    %v1224 = vadd.s32 %v1220, 3
    %v1225 = vand.u32 %v1224, 3
    %vm1226 = vcmp.lt.s32.totalorder %v1225, 2
    %vm1227 = vcmp.eq.s32.totalorder %v1225, 0
    %v1228 = vxor.u32 %v1222, 2147483648
    %v1229 = vsel %vm1227, %v1221, %v1228
    %vm1230 = vcmp.eq.s32.totalorder %v1225, 2
    %v1231 = vxor.u32 %v1221, 2147483648
    %v1232 = vsel %vm1230, %v1231, %v1222
    %v1233 = vsel %vm1226, %v1229, %v1232
    %v1234 = vsel %vm1223, nan, %v1233
    %v1235 = vand.u32 2147483647, %v182
    %vm1236 = vcmp.le.f32.partialorder %v1235, 0.7853982
    %vm1237 = vcmp.lt.s32.totalorder %v182, 0
    %v1238 = vand.u32 %v182, 2139095040
    %v1239 = vshrl.u32 %v1238, 23
    %v1240 = vsub.s32 %v1239, 127
    %v1241 = vand.u32 2147483647, %v182
    %v1242 = vand.u32 %v1241, 8388607
    %v1243 = vor.u32 %v1242, 8388608
    %v1244 = vsub.s32 0, %v1243
    %v1245 = vadd.s32 %v1240, 1
    %vm1246 = vcmp.gt.s32.totalorder %v1245, 0
    %v1247 = vsel %vm1246, %v1245, 0
    %v1248 = vshrl.u32 %v1247, 5
    %v1249 = vand.u32 %v1247, 31
    %v1250 = vsub.s32 32, %v1249
    %v1251 = vshrl.u32 683565275, %v1250
    %v1252 = vshll.u32 683565275, %v1249
    %v1253 = vshrl.u32 2475754826, %v1250
    %v1254 = vor.u32 %v1252, %v1253
    %v1255 = vshll.u32 2475754826, %v1249
    %v1256 = vshrl.u32 2131351028, %v1250
    %v1257 = vor.u32 %v1255, %v1256
    %v1258 = vshll.u32 2131351028, %v1249
    %v1259 = vshrl.u32 2102212464, %v1250
    %v1260 = vor.u32 %v1258, %v1259
    %v1261 = vshll.u32 2102212464, %v1249
    %v1262 = vshrl.u32 920167782, %v1250
    %v1263 = vor.u32 %v1261, %v1262
    %v1264 = vshll.u32 920167782, %v1249
    %v1265 = vshrl.u32 1326507024, %v1250
    %v1266 = vor.u32 %v1264, %v1265
    %vm1267 = vcmp.lt.s32.totalorder %v1248, 1
    %vm1268 = vcmp.lt.s32.totalorder %v1248, 2
    %vm1269 = vcmp.lt.s32.totalorder %v1248, 3
    %vm1270 = vcmp.lt.s32.totalorder %v1248, 4
    %v1271 = vsel %vm1267, %v1251, %v1254
    %v1272 = vsel %vm1270, %v1260, 2102212464
    %v1273 = vsel %vm1269, %v1257, %v1272
    %v1274 = vsel %vm1268, %v1271, %v1273
    %v1275 = vsel %vm1267, %v1254, %v1257
    %v1276 = vsel %vm1270, %v1263, 920167782
    %v1277 = vsel %vm1269, %v1260, %v1276
    %v1278 = vsel %vm1268, %v1275, %v1277
    %v1279 = vsel %vm1267, %v1257, %v1260
    %v1280 = vsel %vm1270, %v1266, 1326507024
    %v1281 = vsel %vm1269, %v1263, %v1280
    %v1282 = vsel %vm1268, %v1279, %v1281
    %v1283 = vshll.u32 %v1243, 8
    %v1284 = vmul.u32.u64.compose %v1283, %v1282
    %v1285 = vextract.low.u32 %v1284
    %v1286 = vextract.high.u32 %v1284
    %v1287 = vmul.u32.u64.compose %v1283, %v1278
    %v1288 = vextract.low.u32 %v1287
    %v1289 = vextract.high.u32 %v1287
    %v1290 = vmul.u32 %v1283, %v1274
    %v1291 = vadd.s32 %v1286, %v1288
    %vm1292 = vc.u32 %v1286, %v1288
    %v1293 = vadd.s32 %v1289, 1
    %v1294 = vsel %vm1292, %v1293, %v1289
    %v1295 = vadd.s32 %v1290, %v1294
    %v1296 = vadd.s32 %v1295, 536870912
    %v1297 = vshrl.u32 %v1296, 30
    %v1298 = vshll.u32 %v1297, 30
    %v1299 = vsub.s32 %v1295, %v1298
    %vm1300 = vcmp.lt.s32.totalorder %v1299, 0
    %v1301 = vsub.s32 0, %v1299
    %v1302 = vsel %vm1300, %v1301, %v1299
    %v1303 = vclz %v1302
    %v1304 = vsub.s32 %v1303, 2
    %vm1305 = vcmp.gt.s32.totalorder 0, %v1304
    %v1306 = vsel %vm1305, 0, %v1304
    %v1307 = vsub.s32 32, %v1306
    %v1308 = vshll.u32 %v1299, %v1306
    %v1309 = vshrl.u32 %v1291, %v1307
    %v1310 = vor.u32 %v1308, %v1309
    %v1311 = vsub.s32 4294967266, %v1306
    %v1312 = vadd.s32 %v1311, 127
    %v1313 = vshll.u32 %v1312, 23
    %v1314 = vor.u32 4788187, %v1313
    %v1315 = vand.u32 2147483647, %v1314
    %v1317 = vcvt.s32.f32 %v1310
    %v1318 = vmul.f32 %v1317, %v1315
    %v1319 = vxor.u32 %v1318, 2147483648
    %v1320 = vsel %vm1237, %v1319, %v1318
    %v1321 = vsub.s32 4, %v1297
    %v1322 = vsel %vm1237, %v1321, %v1297
    %v1323 = vsel %vm1236, %v182, %v1320
    %v1324 = vsel %vm1236, 0, %v1322
    %v1325 = vcosq.f32.pop %v1323
    %v1326 = vsinq.f32.pop %v1323
    %vm1327 = vweird.f32 %v182
    %v1328 = vadd.s32 %v1324, 3
    %v1329 = vand.u32 %v1328, 3
    %vm1330 = vcmp.lt.s32.totalorder %v1329, 2
    %vm1331 = vcmp.eq.s32.totalorder %v1329, 0
    %v1332 = vxor.u32 %v1326, 2147483648
    %v1333 = vsel %vm1331, %v1325, %v1332
    %vm1334 = vcmp.eq.s32.totalorder %v1329, 2
    %v1335 = vxor.u32 %v1325, 2147483648
    %v1336 = vsel %vm1334, %v1335, %v1326
    %v1337 = vsel %vm1330, %v1333, %v1336
    %v1338 = vsel %vm1327, nan, %v1337
    %v1339 = vand.u32 2147483647, %v185
    %vm1340 = vcmp.le.f32.partialorder %v1339, 0.7853982
    %vm1341 = vcmp.lt.s32.totalorder %v185, 0
    %v1342 = vand.u32 %v185, 2139095040
    %v1343 = vshrl.u32 %v1342, 23
    %v1344 = vsub.s32 %v1343, 127
    %v1345 = vand.u32 2147483647, %v185
    %v1346 = vand.u32 %v1345, 8388607
    %v1347 = vor.u32 %v1346, 8388608
    %v1348 = vsub.s32 0, %v1347
    %v1349 = vadd.s32 %v1344, 1
    %vm1350 = vcmp.gt.s32.totalorder %v1349, 0
    %v1351 = vsel %vm1350, %v1349, 0
    %v1352 = vshrl.u32 %v1351, 5
    %v1353 = vand.u32 %v1351, 31
    %v1354 = vsub.s32 32, %v1353
    %v1355 = vshrl.u32 683565275, %v1354
    %v1356 = vshll.u32 683565275, %v1353
    %v1357 = vshrl.u32 2475754826, %v1354
    %v1358 = vor.u32 %v1356, %v1357
    %v1359 = vshll.u32 2475754826, %v1353
    %v1360 = vshrl.u32 2131351028, %v1354
    %v1361 = vor.u32 %v1359, %v1360
    %v1362 = vshll.u32 2131351028, %v1353
    %v1363 = vshrl.u32 2102212464, %v1354
    %v1364 = vor.u32 %v1362, %v1363
    %v1365 = vshll.u32 2102212464, %v1353
    %v1366 = vshrl.u32 920167782, %v1354
    %v1367 = vor.u32 %v1365, %v1366
    %v1368 = vshll.u32 920167782, %v1353
    %v1369 = vshrl.u32 1326507024, %v1354
    %v1370 = vor.u32 %v1368, %v1369
    %vm1371 = vcmp.lt.s32.totalorder %v1352, 1
    %vm1372 = vcmp.lt.s32.totalorder %v1352, 2
    %vm1373 = vcmp.lt.s32.totalorder %v1352, 3
    %vm1374 = vcmp.lt.s32.totalorder %v1352, 4
    %v1375 = vsel %vm1371, %v1355, %v1358
    %v1376 = vsel %vm1374, %v1364, 2102212464
    %v1377 = vsel %vm1373, %v1361, %v1376
    %v1378 = vsel %vm1372, %v1375, %v1377
    %v1379 = vsel %vm1371, %v1358, %v1361
    %v1380 = vsel %vm1374, %v1367, 920167782
    %v1381 = vsel %vm1373, %v1364, %v1380
    %v1382 = vsel %vm1372, %v1379, %v1381
    %v1383 = vsel %vm1371, %v1361, %v1364
    %v1384 = vsel %vm1374, %v1370, 1326507024
    %v1385 = vsel %vm1373, %v1367, %v1384
    %v1386 = vsel %vm1372, %v1383, %v1385
    %v1387 = vshll.u32 %v1347, 8
    %v1388 = vmul.u32.u64.compose %v1387, %v1386
    %v1389 = vextract.low.u32 %v1388
    %v1390 = vextract.high.u32 %v1388
    %v1391 = vmul.u32.u64.compose %v1387, %v1382
    %v1392 = vextract.low.u32 %v1391
    %v1393 = vextract.high.u32 %v1391
    %v1394 = vmul.u32 %v1387, %v1378
    %v1395 = vadd.s32 %v1390, %v1392
    %vm1396 = vc.u32 %v1390, %v1392
    %v1397 = vadd.s32 %v1393, 1
    %v1398 = vsel %vm1396, %v1397, %v1393
    %v1399 = vadd.s32 %v1394, %v1398
    %v1400 = vadd.s32 %v1399, 536870912
    %v1401 = vshrl.u32 %v1400, 30
    %v1402 = vshll.u32 %v1401, 30
    %v1403 = vsub.s32 %v1399, %v1402
    %vm1404 = vcmp.lt.s32.totalorder %v1403, 0
    %v1405 = vsub.s32 0, %v1403
    %v1406 = vsel %vm1404, %v1405, %v1403
    %v1407 = vclz %v1406
    %v1408 = vsub.s32 %v1407, 2
    %vm1409 = vcmp.gt.s32.totalorder 0, %v1408
    %v1410 = vsel %vm1409, 0, %v1408
    %v1411 = vsub.s32 32, %v1410
    %v1412 = vshll.u32 %v1403, %v1410
    %v1413 = vshrl.u32 %v1395, %v1411
    %v1414 = vor.u32 %v1412, %v1413
    %v1415 = vsub.s32 4294967266, %v1410
    %v1416 = vadd.s32 %v1415, 127
    %v1417 = vshll.u32 %v1416, 23
    %v1418 = vor.u32 4788187, %v1417
    %v1419 = vand.u32 2147483647, %v1418
    %v1421 = vcvt.s32.f32 %v1414
    %v1422 = vmul.f32 %v1421, %v1419
    %v1423 = vxor.u32 %v1422, 2147483648
    %v1424 = vsel %vm1341, %v1423, %v1422
    %v1425 = vsub.s32 4, %v1401
    %v1426 = vsel %vm1341, %v1425, %v1401
    %v1427 = vsel %vm1340, %v185, %v1424
    %v1428 = vsel %vm1340, 0, %v1426
    %v1429 = vcosq.f32.pop %v1427
    %v1430 = vsinq.f32.pop %v1427
    %vm1431 = vweird.f32 %v185
    %v1432 = vadd.s32 %v1428, 3
    %v1433 = vand.u32 %v1432, 3
    %vm1434 = vcmp.lt.s32.totalorder %v1433, 2
    %vm1435 = vcmp.eq.s32.totalorder %v1433, 0
    %v1436 = vxor.u32 %v1430, 2147483648
    %v1437 = vsel %vm1435, %v1429, %v1436
    %vm1438 = vcmp.eq.s32.totalorder %v1433, 2
    %v1439 = vxor.u32 %v1429, 2147483648
    %v1440 = vsel %vm1438, %v1439, %v1430
    %v1441 = vsel %vm1434, %v1437, %v1440
    %v1442 = vsel %vm1431, nan, %v1441
    %v1443 = vand.u32 2147483647, %v190
    %vm1444 = vcmp.le.f32.partialorder %v1443, 0.7853982
    %vm1445 = vcmp.lt.s32.totalorder %v190, 0
    %v1446 = vand.u32 %v190, 2139095040
    %v1447 = vshrl.u32 %v1446, 23
    %v1448 = vsub.s32 %v1447, 127
    %v1449 = vand.u32 2147483647, %v190
    %v1450 = vand.u32 %v1449, 8388607
    %v1451 = vor.u32 %v1450, 8388608
    %v1452 = vsub.s32 0, %v1451
    %v1453 = vadd.s32 %v1448, 1
    %vm1454 = vcmp.gt.s32.totalorder %v1453, 0
    %v1455 = vsel %vm1454, %v1453, 0
    %v1456 = vshrl.u32 %v1455, 5
    %v1457 = vand.u32 %v1455, 31
    %v1458 = vsub.s32 32, %v1457
    %v1459 = vshrl.u32 683565275, %v1458
    %v1460 = vshll.u32 683565275, %v1457
    %v1461 = vshrl.u32 2475754826, %v1458
    %v1462 = vor.u32 %v1460, %v1461
    %v1463 = vshll.u32 2475754826, %v1457
    %v1464 = vshrl.u32 2131351028, %v1458
    %v1465 = vor.u32 %v1463, %v1464
    %v1466 = vshll.u32 2131351028, %v1457
    %v1467 = vshrl.u32 2102212464, %v1458
    %v1468 = vor.u32 %v1466, %v1467
    %v1469 = vshll.u32 2102212464, %v1457
    %v1470 = vshrl.u32 920167782, %v1458
    %v1471 = vor.u32 %v1469, %v1470
    %v1472 = vshll.u32 920167782, %v1457
    %v1473 = vshrl.u32 1326507024, %v1458
    %v1474 = vor.u32 %v1472, %v1473
    %vm1475 = vcmp.lt.s32.totalorder %v1456, 1
    %vm1476 = vcmp.lt.s32.totalorder %v1456, 2
    %vm1477 = vcmp.lt.s32.totalorder %v1456, 3
    %vm1478 = vcmp.lt.s32.totalorder %v1456, 4
    %v1479 = vsel %vm1475, %v1459, %v1462
    %v1480 = vsel %vm1478, %v1468, 2102212464
    %v1481 = vsel %vm1477, %v1465, %v1480
    %v1482 = vsel %vm1476, %v1479, %v1481
    %v1483 = vsel %vm1475, %v1462, %v1465
    %v1484 = vsel %vm1478, %v1471, 920167782
    %v1485 = vsel %vm1477, %v1468, %v1484
    %v1486 = vsel %vm1476, %v1483, %v1485
    %v1487 = vsel %vm1475, %v1465, %v1468
    %v1488 = vsel %vm1478, %v1474, 1326507024
    %v1489 = vsel %vm1477, %v1471, %v1488
    %v1490 = vsel %vm1476, %v1487, %v1489
    %v1491 = vshll.u32 %v1451, 8
    %v1492 = vmul.u32.u64.compose %v1491, %v1490
    %v1493 = vextract.low.u32 %v1492
    %v1494 = vextract.high.u32 %v1492
    %v1495 = vmul.u32.u64.compose %v1491, %v1486
    %v1496 = vextract.low.u32 %v1495
    %v1497 = vextract.high.u32 %v1495
    %v1498 = vmul.u32 %v1491, %v1482
    %v1499 = vadd.s32 %v1494, %v1496
    %vm1500 = vc.u32 %v1494, %v1496
    %v1501 = vadd.s32 %v1497, 1
    %v1502 = vsel %vm1500, %v1501, %v1497
    %v1503 = vadd.s32 %v1498, %v1502
    %v1504 = vadd.s32 %v1503, 536870912
    %v1505 = vshrl.u32 %v1504, 30
    %v1506 = vshll.u32 %v1505, 30
    %v1507 = vsub.s32 %v1503, %v1506
    %vm1508 = vcmp.lt.s32.totalorder %v1507, 0
    %v1509 = vsub.s32 0, %v1507
    %v1510 = vsel %vm1508, %v1509, %v1507
    %v1511 = vclz %v1510
    %v1512 = vsub.s32 %v1511, 2
    %vm1513 = vcmp.gt.s32.totalorder 0, %v1512
    %v1514 = vsel %vm1513, 0, %v1512
    %v1515 = vsub.s32 32, %v1514
    %v1516 = vshll.u32 %v1507, %v1514
    %v1517 = vshrl.u32 %v1499, %v1515
    %v1518 = vor.u32 %v1516, %v1517
    %v1519 = vsub.s32 4294967266, %v1514
    %v1520 = vadd.s32 %v1519, 127
    %v1521 = vshll.u32 %v1520, 23
    %v1522 = vor.u32 4788187, %v1521
    %v1523 = vand.u32 2147483647, %v1522
    %v1525 = vcvt.s32.f32 %v1518
    %v1526 = vmul.f32 %v1525, %v1523
    %v1527 = vxor.u32 %v1526, 2147483648
    %v1528 = vsel %vm1445, %v1527, %v1526
    %v1529 = vsub.s32 4, %v1505
    %v1530 = vsel %vm1445, %v1529, %v1505
    %v1531 = vsel %vm1444, %v190, %v1528
    %v1532 = vsel %vm1444, 0, %v1530
    %v1533 = vcosq.f32.pop %v1531
    %v1534 = vsinq.f32.pop %v1531
    %vm1535 = vweird.f32 %v190
    %v1536 = vadd.s32 %v1532, 3
    %v1537 = vand.u32 %v1536, 3
    %vm1538 = vcmp.lt.s32.totalorder %v1537, 2
    %vm1539 = vcmp.eq.s32.totalorder %v1537, 0
    %v1540 = vxor.u32 %v1534, 2147483648
    %v1541 = vsel %vm1539, %v1533, %v1540
    %vm1542 = vcmp.eq.s32.totalorder %v1537, 2
    %v1543 = vxor.u32 %v1533, 2147483648
    %v1544 = vsel %vm1542, %v1543, %v1534
    %v1545 = vsel %vm1538, %v1541, %v1544
    %v1546 = vsel %vm1535, nan, %v1545
    %1547 = vst [vmem:[#allocation2] sm:$0xff] %v298
    %1548 = vst [vmem:[#allocation2 + $0x8] sm:$0xff] %v402
    %1549 = vst [vmem:[#allocation2 + $0x10] sm:$0xff] %v506
    %1550 = vst [vmem:[#allocation2 + $0x18] sm:$0xff] %v610
    %1551 = vst [vmem:[#allocation2 + $0x20] sm:$0xff] %v714
    %1552 = vst [vmem:[#allocation2 + $0x28] sm:$0xff] %v818
    %1553 = vst [vmem:[#allocation2 + $0x30] sm:$0xff] %v922
    %1554 = vst [vmem:[#allocation2 + $0x38] sm:$0xff] %v1026
    %1555 = vst [vmem:[#allocation2 + $0x40] sm:$0xff] %v1130
    %1556 = vst [vmem:[#allocation2 + $0x48] sm:$0xff] %v1234
    %1557 = vst [vmem:[#allocation2 + $0x50] sm:$0xff] %v1338
    %1558 = vst [vmem:[#allocation2 + $0x58] sm:$0xff] %v1442
    %1559 = vst [vmem:[#allocation2 + $0x60] sm:$0xff] %v1546
    // Predicated region
    $region14: #{tpu_custom_call.1} parent=1 // pred_check
      _
    $region15: #{tpu_custom_call.1} parent=1 // pred_check_branch
      %1561 = sbr.rel (0) target = $region17
    $region16: #{tpu_custom_call.1} parent=1 // pred_region
      %s1563 = ssub.s32 1664, 1664
      %1564 = vsyncadd [#allocation3], %s1563
      %s1565 = sshll.u32 [#allocation2], 4
      %s1566 = int_to_ptr.vmem [resolvable:$true] %s1565
      %1571 = dma.vmem_to_hbm [thread:$0]  %s1566, 1664, %s3, [#allocation3], 128, 128, 8
    $region17: #{tpu_custom_call.1} parent=1 // pred_fallthru
      _
    // Predicated region
    $region18: #{tpu_custom_call.1} parent=1 // pred_check
      _
    $region19: #{tpu_custom_call.1} parent=1 // pred_check_branch
      %1573 = sbr.rel (0) target = $region21
    $region20: #{tpu_custom_call.1} parent=1 // pred_region
      %1574 = dma.done [#allocation3], 1664
    $region21: #{tpu_custom_call.1} parent=1 // pred_fallthru
      _
    %1575 = vsyncpa [#allocation3], 1

</llo_original>
